<compile_context>
chip_gen: v7x
topology: tpu7x:2x2x1
jax: 0.10.0
libtpu: 0.0.40
codegen_flags: <defaults>
</compile_context>

<pallas_src>
import jax
import jax.numpy as jnp
from jax.experimental import pallas as pl
from jax.experimental.pallas import tpu as pltpu

PADDING_NUMBER = 0
NUM_CLASS = 11
EMB_SIZE = 3
H_SIZE = 32
Z_SIZE = 16
GRID_SIDE = 30
TOKENS = GRID_SIDE * GRID_SIDE   # 900
ROW_TILE = 512                   # tokens per grid step (multiple of 128, lane axis)


def _vae_kernel(idx_ref, eps_ref,
                fe1_ref, be1_ref,       # fused (W_enc1 @ emb.T) [32,11], b_enc1 [32,1]
                we2_ref, be2_ref,        # [16,32], [16,1]
                wmu_ref, bmu_ref,        # [16,16], [16,1]
                wd1_ref, bd1_ref,        # [32,16], [32,1]
                wd2_ref, bd2_ref,        # [3,32],  [3,1]
                wpr_ref, bpr_ref,        # [11,3],  [11,1]
                out_ref):
    f32 = jnp.float32

    idx = idx_ref[...]                                            # [1, T] int32
    tile = idx.shape[1]
    classes = jax.lax.broadcasted_iota(jnp.int32, (NUM_CLASS, tile), 0)
    one_hot = (classes == idx).astype(f32)                        # [11, T]

    # embedding + encoder Linear(3,32) fused into one lane-dense matmul
    h = jnp.maximum(
        jnp.dot(fe1_ref[...], one_hot, preferred_element_type=f32) + be1_ref[...],
        0.0)                                                      # [32, T]
    feat = jnp.maximum(
        jnp.dot(we2_ref[...], h, preferred_element_type=f32) + be2_ref[...],
        0.0)                                                      # [16, T]

    # mu_layer applied twice in the reference forward -> sigma == mu
    mu = jnp.dot(wmu_ref[...], feat, preferred_element_type=f32) + bmu_ref[...]
    std = jnp.exp(0.5 * mu)                                       # EUP slot
    z = mu + std * eps_ref[...]                                   # [16, T]

    # decoder: Linear(16,32)+ReLU -> Linear(32,3)+ReLU
    d = jnp.maximum(
        jnp.dot(wd1_ref[...], z, preferred_element_type=f32) + bd1_ref[...], 0.0)
    d = jnp.maximum(
        jnp.dot(wd2_ref[...], d, preferred_element_type=f32) + bd2_ref[...], 0.0)

    # proj: Linear(3,11)  ->  lane-dense [11, T] output block
    logits = jnp.dot(wpr_ref[...], d, preferred_element_type=f32) + bpr_ref[...]
    out_ref[...] = logits[None]                                   # (1, 11, T)


def compressed_vae_forward(x, params, eps, *, row_tile=ROW_TILE):
    """x: int array reshapeable to [B, 900] (e.g. [B, 30, 30]).
    eps: standard-normal noise in feature-major layout [Z_SIZE, B, 900] f32.
    Returns [B, 11, 30, 30] float32 logits, matching the PyTorch forward."""
    assert row_tile % 128 == 0, "row_tile must be a multiple of 128 (lane axis)"
    batch = x.shape[0] if x.ndim >= 3 else 1
    idx = x.reshape(batch, TOKENS).astype(jnp.int32)

    tokens_pad = pl.cdiv(TOKENS, row_tile) * row_tile     # 1024 for row_tile=512
    tpi = tokens_pad // row_tile                          # tiles per image
    pad = tokens_pad - TOKENS

    # padded tokens use padding_number -> zero embedding; sliced off after the call
    idx_p = jnp.pad(idx, ((0, 0), (0, pad)), constant_values=PADDING_NUMBER)
    idx_flat = idx_p.reshape(1, batch * tokens_pad)

    eps = eps.astype(jnp.float32)                         # [Z, B, 900]
    eps_p = jnp.pad(eps, ((0, 0), (0, 0), (0, pad)))      # [Z, B, tokens_pad]
    eps_flat = eps_p.reshape(Z_SIZE, batch * tokens_pad)

    # embedding folded into enc1 (exact: no nonlinearity between them)
    fused_e1 = params["w_enc1"] @ params["embedding"].T   # [32, 11]

    weights = (fused_e1, params["b_enc1"],
               params["w_enc2"], params["b_enc2"],
               params["w_mu"], params["b_mu"],
               params["w_dec1"], params["b_dec1"],
               params["w_dec2"], params["b_dec2"],
               params["w_proj"], params["b_proj"])

    def tok_map(b, t):
        return (0, b * tpi + t)

    def resident(shape):
        # constant index_map: DMA'd to VMEM once, stays resident across all tiles
        return pl.BlockSpec(shape, lambda b, t: (0, 0))

    weight_bytes = sum(int(w.size) * w.dtype.itemsize for w in weights)
    flops_per_tok = 2 * (NUM_CLASS * H_SIZE + H_SIZE * Z_SIZE + Z_SIZE * Z_SIZE
                         + Z_SIZE * H_SIZE + H_SIZE * EMB_SIZE
                         + EMB_SIZE * NUM_CLASS) + 8 * Z_SIZE
    n_pad_tokens = batch * tokens_pad
    cost = pl.CostEstimate(
        flops=int(n_pad_tokens * flops_per_tok),
        transcendentals=int(n_pad_tokens * Z_SIZE),
        bytes_accessed=int(n_pad_tokens * 4 * (1 + Z_SIZE + NUM_CLASS) + weight_bytes),
    )

    out_padded = pl.pallas_call(
        _vae_kernel,
        out_shape=jax.ShapeDtypeStruct((batch, NUM_CLASS, tokens_pad), jnp.float32),
        grid_spec=pltpu.PrefetchScalarGridSpec(
            num_scalar_prefetch=0,
            grid=(batch, tpi),
            in_specs=[pl.BlockSpec((1, row_tile), tok_map),
                      pl.BlockSpec((Z_SIZE, row_tile), tok_map)]
                     + [resident(w.shape) for w in weights],
            out_specs=pl.BlockSpec((1, NUM_CLASS, row_tile), lambda b, t: (b, 0, t)),
        ),
        compiler_params=pltpu.CompilerParams(
            dimension_semantics=("parallel", "parallel")),
        cost_estimate=cost,
    )(idx_flat, eps_flat, *weights)

    # Slice off per-image padding; NCHW layout comes straight out of the kernel,
    # so this reshape is free (no permute of the minor dim).
    out = out_padded[:, :, :TOKENS]
    return out.reshape(batch, NUM_CLASS, GRID_SIDE, GRID_SIDE)


def init_params(key):
    """Deterministic init mirroring PyTorch defaults.

    Linear weights are kept in native PyTorch (out, in) layout (the transposed
    kernel computes W @ x); biases are (out, 1). Embedding row 0 is zeroed
    (padding_idx=0)."""
    ks = jax.random.split(key, 8)

    def linear(k, in_f, out_f):
        kw, kb = jax.random.split(k)
        bound = 1.0 / jnp.sqrt(jnp.float32(in_f))
        w = jax.random.uniform(kw, (out_f, in_f), jnp.float32, -bound, bound)
        b = jax.random.uniform(kb, (out_f, 1), jnp.float32, -bound, bound)
        return w, b

    emb = jax.random.normal(ks[0], (NUM_CLASS, EMB_SIZE), jnp.float32)
    emb = emb.at[PADDING_NUMBER].set(0.0)

    w_e1, b_e1 = linear(ks[1], EMB_SIZE, H_SIZE)
    w_e2, b_e2 = linear(ks[2], H_SIZE, Z_SIZE)
    w_mu, b_mu = linear(ks[3], Z_SIZE, Z_SIZE)
    w_sg, b_sg = linear(ks[4], Z_SIZE, Z_SIZE)    # sigma_layer: constructed but unused in forward
    w_d1, b_d1 = linear(ks[5], Z_SIZE, H_SIZE)
    w_d2, b_d2 = linear(ks[6], H_SIZE, EMB_SIZE)
    w_pr, b_pr = linear(ks[7], EMB_SIZE, NUM_CLASS)

    return {
        "embedding": emb,
        "w_enc1": w_e1, "b_enc1": b_e1,
        "w_enc2": w_e2, "b_enc2": b_e2,
        "w_mu": w_mu, "b_mu": b_mu,
        "w_sigma": w_sg, "b_sigma": b_sg,   # unused, like the reference module
        "w_dec1": w_d1, "b_dec1": b_d1,
        "w_dec2": w_d2, "b_dec2": b_d2,
        "w_proj": w_pr, "b_proj": b_pr,
    }


def ref_forward(x, p, eps_zbt):
    """Pure-JAX reference of compressed_vae.forward (same eps, eps given as [Z,B,900])."""
    batch = x.shape[0] if x.ndim >= 3 else 1
    idx = x.reshape(batch, TOKENS).astype(jnp.int32)
    embed = jnp.take(p["embedding"], idx, axis=0)                       # [B, 900, 3]
    h = jnp.maximum(embed @ p["w_enc1"].T + p["b_enc1"][:, 0], 0.0)
    feat = jnp.maximum(h @ p["w_enc2"].T + p["b_enc2"][:, 0], 0.0)
    mu = feat @ p["w_mu"].T + p["b_mu"][:, 0]
    std = jnp.exp(0.5 * mu)                                             # sigma == mu
    eps = jnp.transpose(eps_zbt, (1, 2, 0))                             # [B, 900, 16]
    z = mu + std * eps
    d = jnp.maximum(z @ p["w_dec1"].T + p["b_dec1"][:, 0], 0.0)
    d = jnp.maximum(d @ p["w_dec2"].T + p["b_dec2"][:, 0], 0.0)
    out = d @ p["w_proj"].T + p["b_proj"][:, 0]
    out = out.reshape(-1, GRID_SIDE, GRID_SIDE, NUM_CLASS)
    return jnp.transpose(out, (0, 3, 1, 2))


if __name__ == "__main__":
    key = jax.random.PRNGKey(0)
    k_param, k_x, k_eps = jax.random.split(key, 3)

    B = 2
    params = init_params(k_param)
    # integer class map with values in [0, 11), like the module expects
    x = jax.random.randint(k_x, (B, GRID_SIDE, GRID_SIDE), 0, NUM_CLASS, jnp.int32)
    # torch.randn_like(std) equivalent, generated host-side in feature-major layout
    eps = jax.random.normal(k_eps, (Z_SIZE, B, TOKENS), jnp.float32)

    out = compressed_vae_forward(x, params, eps)
    out = jax.block_until_ready(out)

    expected = ref_forward(x, params, eps)
    assert out.shape == (B, NUM_CLASS, GRID_SIDE, GRID_SIDE), out.shape
    assert jnp.allclose(out, expected, atol=1e-3, rtol=1e-3), \
        float(jnp.max(jnp.abs(out - expected)))

    print("KERNEL_OK")
</pallas_src>

<mosaic_0001>
module attributes {stable_mosaic.version = 11 : i64} {
  func.func @_vae_kernel(%arg0: i32, %arg1: i32, %arg2: memref<1x512xi32, #tpu.memory_space<vmem>>, %arg3: memref<16x512xf32, #tpu.memory_space<vmem>>, %arg4: memref<32x11xf32, #tpu.memory_space<vmem>>, %arg5: memref<32x1xf32, #tpu.memory_space<vmem>>, %arg6: memref<16x32xf32, #tpu.memory_space<vmem>>, %arg7: memref<16x1xf32, #tpu.memory_space<vmem>>, %arg8: memref<16x16xf32, #tpu.memory_space<vmem>>, %arg9: memref<16x1xf32, #tpu.memory_space<vmem>>, %arg10: memref<32x16xf32, #tpu.memory_space<vmem>>, %arg11: memref<32x1xf32, #tpu.memory_space<vmem>>, %arg12: memref<3x32xf32, #tpu.memory_space<vmem>>, %arg13: memref<3x1xf32, #tpu.memory_space<vmem>>, %arg14: memref<11x3xf32, #tpu.memory_space<vmem>>, %arg15: memref<11x1xf32, #tpu.memory_space<vmem>>, %arg16: memref<1x11x512xf32, #tpu.memory_space<vmem>>) attributes {dimension_semantics = [#tpu.dimension_semantics<parallel>, #tpu.dimension_semantics<parallel>], iteration_bounds = array<i64: 2, 2>, scalar_prefetch = 0 : i64, scratch_operands = 0 : i64, tpu.core_type = #tpu.core_type<tc>, window_params = [{transform_indices = @transform_0, window_bounds = array<i64: 1, 512>}, {transform_indices = @transform_1, window_bounds = array<i64: 16, 512>}, {pipeline_mode = #tpu.pipeline_mode<synchronous>, transform_indices = @transform_2, window_bounds = array<i64: 32, 11>}, {pipeline_mode = #tpu.pipeline_mode<synchronous>, transform_indices = @transform_3, window_bounds = array<i64: 32, 1>}, {pipeline_mode = #tpu.pipeline_mode<synchronous>, transform_indices = @transform_4, window_bounds = array<i64: 16, 32>}, {pipeline_mode = #tpu.pipeline_mode<synchronous>, transform_indices = @transform_5, window_bounds = array<i64: 16, 1>}, {pipeline_mode = #tpu.pipeline_mode<synchronous>, transform_indices = @transform_6, window_bounds = array<i64: 16, 16>}, {pipeline_mode = #tpu.pipeline_mode<synchronous>, transform_indices = @transform_7, window_bounds = array<i64: 16, 1>}, {pipeline_mode = #tpu.pipeline_mode<synchronous>, transform_indices = @transform_8, window_bounds = array<i64: 32, 16>}, {pipeline_mode = #tpu.pipeline_mode<synchronous>, transform_indices = @transform_9, window_bounds = array<i64: 32, 1>}, {pipeline_mode = #tpu.pipeline_mode<synchronous>, transform_indices = @transform_10, window_bounds = array<i64: 3, 32>}, {pipeline_mode = #tpu.pipeline_mode<synchronous>, transform_indices = @transform_11, window_bounds = array<i64: 3, 1>}, {pipeline_mode = #tpu.pipeline_mode<synchronous>, transform_indices = @transform_12, window_bounds = array<i64: 11, 3>}, {pipeline_mode = #tpu.pipeline_mode<synchronous>, transform_indices = @transform_13, window_bounds = array<i64: 11, 1>}, {transform_indices = @transform_14, window_bounds = array<i64: 1, 11, 512>}]} {
    %c0 = arith.constant 0 : index
    %c0_0 = arith.constant 0 : index
    %0 = vector.load %arg2[%c0, %c0_0] : memref<1x512xi32, #tpu.memory_space<vmem>>, vector<1x512xi32>
    %1 = tpu.iota {dimensions = array<i32: 0>} : vector<11x512xi32>
    %2 = vector.broadcast %0 : vector<1x512xi32> to vector<11x512xi32>
    %3 = arith.cmpi eq, %1, %2 : vector<11x512xi32>
    %4 = arith.extui %3 : vector<11x512xi1> to vector<11x512xi32>
    %5 = arith.sitofp %4 : vector<11x512xi32> to vector<11x512xf32>
    %c0_1 = arith.constant 0 : index
    %c0_2 = arith.constant 0 : index
    %6 = vector.load %arg4[%c0_1, %c0_2] : memref<32x11xf32, #tpu.memory_space<vmem>>, vector<32x11xf32>
    %cst = arith.constant dense<0.000000e+00> : vector<32x512xf32>
    %7 = tpu.matmul %6, %5, %cst {dimension_numbers = #tpu.dot_dimension_numbers<[1], [0], [0], [1], [0, 0, 1, 1], [], []>} : vector<32x11xf32>, vector<11x512xf32>, vector<32x512xf32> -> vector<32x512xf32>
    %c0_3 = arith.constant 0 : index
    %c0_4 = arith.constant 0 : index
    %8 = vector.load %arg5[%c0_3, %c0_4] : memref<32x1xf32, #tpu.memory_space<vmem>>, vector<32x1xf32>
    %9 = vector.broadcast %8 : vector<32x1xf32> to vector<32x512xf32>
    %10 = arith.addf %7, %9 : vector<32x512xf32>
    %cst_5 = arith.constant 0.000000e+00 : f32
    %11 = vector.broadcast %cst_5 : f32 to vector<32x512xf32>
    %12 = arith.maximumf %10, %11 : vector<32x512xf32>
    %c0_6 = arith.constant 0 : index
    %c0_7 = arith.constant 0 : index
    %13 = vector.load %arg6[%c0_6, %c0_7] : memref<16x32xf32, #tpu.memory_space<vmem>>, vector<16x32xf32>
    %cst_8 = arith.constant dense<0.000000e+00> : vector<16x512xf32>
    %14 = tpu.matmul %13, %12, %cst_8 {dimension_numbers = #tpu.dot_dimension_numbers<[1], [0], [0], [1], [0, 0, 1, 1], [], []>} : vector<16x32xf32>, vector<32x512xf32>, vector<16x512xf32> -> vector<16x512xf32>
    %c0_9 = arith.constant 0 : index
    %c0_10 = arith.constant 0 : index
    %15 = vector.load %arg7[%c0_9, %c0_10] : memref<16x1xf32, #tpu.memory_space<vmem>>, vector<16x1xf32>
    %16 = vector.broadcast %15 : vector<16x1xf32> to vector<16x512xf32>
    %17 = arith.addf %14, %16 : vector<16x512xf32>
    %cst_11 = arith.constant 0.000000e+00 : f32
    %18 = vector.broadcast %cst_11 : f32 to vector<16x512xf32>
    %19 = arith.maximumf %17, %18 : vector<16x512xf32>
    %c0_12 = arith.constant 0 : index
    %c0_13 = arith.constant 0 : index
    %20 = vector.load %arg8[%c0_12, %c0_13] : memref<16x16xf32, #tpu.memory_space<vmem>>, vector<16x16xf32>
    %cst_14 = arith.constant dense<0.000000e+00> : vector<16x512xf32>
    %21 = tpu.matmul %20, %19, %cst_14 {dimension_numbers = #tpu.dot_dimension_numbers<[1], [0], [0], [1], [0, 0, 1, 1], [], []>} : vector<16x16xf32>, vector<16x512xf32>, vector<16x512xf32> -> vector<16x512xf32>
    %c0_15 = arith.constant 0 : index
    %c0_16 = arith.constant 0 : index
    %22 = vector.load %arg9[%c0_15, %c0_16] : memref<16x1xf32, #tpu.memory_space<vmem>>, vector<16x1xf32>
    %23 = vector.broadcast %22 : vector<16x1xf32> to vector<16x512xf32>
    %24 = arith.addf %21, %23 : vector<16x512xf32>
    %cst_17 = arith.constant 5.000000e-01 : f32
    %25 = vector.broadcast %cst_17 : f32 to vector<16x512xf32>
    %26 = arith.mulf %25, %24 : vector<16x512xf32>
    %27 = math.exp %26 : vector<16x512xf32>
    %c0_18 = arith.constant 0 : index
    %c0_19 = arith.constant 0 : index
    %28 = vector.load %arg3[%c0_18, %c0_19] : memref<16x512xf32, #tpu.memory_space<vmem>>, vector<16x512xf32>
    %29 = arith.mulf %27, %28 : vector<16x512xf32>
    %30 = arith.addf %24, %29 : vector<16x512xf32>
    %c0_20 = arith.constant 0 : index
    %c0_21 = arith.constant 0 : index
    %31 = vector.load %arg10[%c0_20, %c0_21] : memref<32x16xf32, #tpu.memory_space<vmem>>, vector<32x16xf32>
    %cst_22 = arith.constant dense<0.000000e+00> : vector<32x512xf32>
    %32 = tpu.matmul %31, %30, %cst_22 {dimension_numbers = #tpu.dot_dimension_numbers<[1], [0], [0], [1], [0, 0, 1, 1], [], []>} : vector<32x16xf32>, vector<16x512xf32>, vector<32x512xf32> -> vector<32x512xf32>
    %c0_23 = arith.constant 0 : index
    %c0_24 = arith.constant 0 : index
    %33 = vector.load %arg11[%c0_23, %c0_24] : memref<32x1xf32, #tpu.memory_space<vmem>>, vector<32x1xf32>
    %34 = vector.broadcast %33 : vector<32x1xf32> to vector<32x512xf32>
    %35 = arith.addf %32, %34 : vector<32x512xf32>
    %cst_25 = arith.constant 0.000000e+00 : f32
    %36 = vector.broadcast %cst_25 : f32 to vector<32x512xf32>
    %37 = arith.maximumf %35, %36 : vector<32x512xf32>
    %c0_26 = arith.constant 0 : index
    %c0_27 = arith.constant 0 : index
    %38 = vector.load %arg12[%c0_26, %c0_27] : memref<3x32xf32, #tpu.memory_space<vmem>>, vector<3x32xf32>
    %cst_28 = arith.constant dense<0.000000e+00> : vector<3x512xf32>
    %39 = tpu.matmul %38, %37, %cst_28 {dimension_numbers = #tpu.dot_dimension_numbers<[1], [0], [0], [1], [0, 0, 1, 1], [], []>} : vector<3x32xf32>, vector<32x512xf32>, vector<3x512xf32> -> vector<3x512xf32>
    %c0_29 = arith.constant 0 : index
    %c0_30 = arith.constant 0 : index
    %40 = vector.load %arg13[%c0_29, %c0_30] : memref<3x1xf32, #tpu.memory_space<vmem>>, vector<3x1xf32>
    %41 = vector.broadcast %40 : vector<3x1xf32> to vector<3x512xf32>
    %42 = arith.addf %39, %41 : vector<3x512xf32>
    %cst_31 = arith.constant 0.000000e+00 : f32
    %43 = vector.broadcast %cst_31 : f32 to vector<3x512xf32>
    %44 = arith.maximumf %42, %43 : vector<3x512xf32>
    %c0_32 = arith.constant 0 : index
    %c0_33 = arith.constant 0 : index
    %45 = vector.load %arg14[%c0_32, %c0_33] : memref<11x3xf32, #tpu.memory_space<vmem>>, vector<11x3xf32>
    %cst_34 = arith.constant dense<0.000000e+00> : vector<11x512xf32>
    %46 = tpu.matmul %45, %44, %cst_34 {dimension_numbers = #tpu.dot_dimension_numbers<[1], [0], [0], [1], [0, 0, 1, 1], [], []>} : vector<11x3xf32>, vector<3x512xf32>, vector<11x512xf32> -> vector<11x512xf32>
    %c0_35 = arith.constant 0 : index
    %c0_36 = arith.constant 0 : index
    %47 = vector.load %arg15[%c0_35, %c0_36] : memref<11x1xf32, #tpu.memory_space<vmem>>, vector<11x1xf32>
    %48 = vector.broadcast %47 : vector<11x1xf32> to vector<11x512xf32>
    %49 = arith.addf %46, %48 : vector<11x512xf32>
    %50 = vector.shape_cast %49 : vector<11x512xf32> to vector<1x11x512xf32>
    %c0_37 = arith.constant 0 : index
    %c0_38 = arith.constant 0 : index
    %c0_39 = arith.constant 0 : index
    %51 = vector.load %arg16[%c0_37, %c0_38, %c0_39] : memref<1x11x512xf32, #tpu.memory_space<vmem>>, vector<1x11x512xf32>
    tpu.vector_store %arg16[%c0_37, %c0_38, %c0_39], %50 {strides = array<i32>} : memref<1x11x512xf32, #tpu.memory_space<vmem>>, vector<1x11x512xf32>,
    return
  }
  func.func @transform_0(%arg0: i32, %arg1: i32) -> (i32, i32) {
    %c2_i32 = arith.constant 2 : i32
    %0 = arith.muli %arg0, %c2_i32 : i32
    %1 = arith.addi %0, %arg1 : i32
    %c0_i32 = arith.constant 0 : i32
    %c0_i32_0 = arith.constant 0 : i32
    return %c0_i32, %1 : i32, i32
  }
  func.func @transform_1(%arg0: i32, %arg1: i32) -> (i32, i32) {
    %c2_i32 = arith.constant 2 : i32
    %0 = arith.muli %arg0, %c2_i32 : i32
    %1 = arith.addi %0, %arg1 : i32
    %c0_i32 = arith.constant 0 : i32
    %c0_i32_0 = arith.constant 0 : i32
    return %c0_i32, %1 : i32, i32
  }
  func.func @transform_2(%arg0: i32, %arg1: i32) -> (i32, i32) {
    %c0_i32 = arith.constant 0 : i32
    %c0_i32_0 = arith.constant 0 : i32
    %c0_i32_1 = arith.constant 0 : i32
    return %c0_i32, %c0_i32_0 : i32, i32
  }
  func.func @transform_3(%arg0: i32, %arg1: i32) -> (i32, i32) {
    %c0_i32 = arith.constant 0 : i32
    %c0_i32_0 = arith.constant 0 : i32
    %c0_i32_1 = arith.constant 0 : i32
    return %c0_i32, %c0_i32_0 : i32, i32
  }
  func.func @transform_4(%arg0: i32, %arg1: i32) -> (i32, i32) {
    %c0_i32 = arith.constant 0 : i32
    %c0_i32_0 = arith.constant 0 : i32
    %c0_i32_1 = arith.constant 0 : i32
    return %c0_i32, %c0_i32_0 : i32, i32
  }
  func.func @transform_5(%arg0: i32, %arg1: i32) -> (i32, i32) {
    %c0_i32 = arith.constant 0 : i32
    %c0_i32_0 = arith.constant 0 : i32
    %c0_i32_1 = arith.constant 0 : i32
    return %c0_i32, %c0_i32_0 : i32, i32
  }
  func.func @transform_6(%arg0: i32, %arg1: i32) -> (i32, i32) {
    %c0_i32 = arith.constant 0 : i32
    %c0_i32_0 = arith.constant 0 : i32
    %c0_i32_1 = arith.constant 0 : i32
    return %c0_i32, %c0_i32_0 : i32, i32
  }
  func.func @transform_7(%arg0: i32, %arg1: i32) -> (i32, i32) {
    %c0_i32 = arith.constant 0 : i32
    %c0_i32_0 = arith.constant 0 : i32
    %c0_i32_1 = arith.constant 0 : i32
    return %c0_i32, %c0_i32_0 : i32, i32
  }
  func.func @transform_8(%arg0: i32, %arg1: i32) -> (i32, i32) {
    %c0_i32 = arith.constant 0 : i32
    %c0_i32_0 = arith.constant 0 : i32
    %c0_i32_1 = arith.constant 0 : i32
    return %c0_i32, %c0_i32_0 : i32, i32
  }
  func.func @transform_9(%arg0: i32, %arg1: i32) -> (i32, i32) {
    %c0_i32 = arith.constant 0 : i32
    %c0_i32_0 = arith.constant 0 : i32
    %c0_i32_1 = arith.constant 0 : i32
    return %c0_i32, %c0_i32_0 : i32, i32
  }
  func.func @transform_10(%arg0: i32, %arg1: i32) -> (i32, i32) {
    %c0_i32 = arith.constant 0 : i32
    %c0_i32_0 = arith.constant 0 : i32
    %c0_i32_1 = arith.constant 0 : i32
    return %c0_i32, %c0_i32_0 : i32, i32
  }
  func.func @transform_11(%arg0: i32, %arg1: i32) -> (i32, i32) {
    %c0_i32 = arith.constant 0 : i32
    %c0_i32_0 = arith.constant 0 : i32
    %c0_i32_1 = arith.constant 0 : i32
    return %c0_i32, %c0_i32_0 : i32, i32
  }
  func.func @transform_12(%arg0: i32, %arg1: i32) -> (i32, i32) {
    %c0_i32 = arith.constant 0 : i32
    %c0_i32_0 = arith.constant 0 : i32
    %c0_i32_1 = arith.constant 0 : i32
    return %c0_i32, %c0_i32_0 : i32, i32
  }
  func.func @transform_13(%arg0: i32, %arg1: i32) -> (i32, i32) {
    %c0_i32 = arith.constant 0 : i32
    %c0_i32_0 = arith.constant 0 : i32
    %c0_i32_1 = arith.constant 0 : i32
    return %c0_i32, %c0_i32_0 : i32, i32
  }
  func.func @transform_14(%arg0: i32, %arg1: i32) -> (i32, i32, i32) {
    %c0_i32 = arith.constant 0 : i32
    %c0_i32_0 = arith.constant 0 : i32
    return %arg0, %c0_i32, %arg1 : i32, i32, i32
  }
}

</mosaic_0001>

<llo_original>
// kernel: tpu_custom_call.1
$region0: #{tpu_custom_call.1}
  #allocation0 [shape = 'u32[]', space=smem, size = 0x4, offset = 0x4, fixed_abs, tag = 'smem constant byte address 0x4 - core index']
  #allocation1 [shape = 'u32[144,128]{1,0:T(1,128)}', space=vmem, size = 0x12000, scoped, tag = 'internal scratch']
  %s0 = inlined_call_operand.vmem [shape: s32[1,2048], index: 0, kind: input, shape index: {}]
  %s1 = inlined_call_operand.hbm [shape: f32[16,2048], index: 1, kind: input, shape index: {}]
  %s2 = inlined_call_operand.vmem [shape: f32[32,11], index: 2, kind: input, shape index: {}]
  %s3 = inlined_call_operand.vmem [shape: f32[32,1], index: 3, kind: input, shape index: {}]
  %s4 = inlined_call_operand.vmem [shape: f32[16,32], index: 4, kind: input, shape index: {}]
  %s5 = inlined_call_operand.vmem [shape: f32[16,1], index: 5, kind: input, shape index: {}]
  %s6 = inlined_call_operand.vmem [shape: f32[16,16], index: 6, kind: input, shape index: {}]
  %s7 = inlined_call_operand.vmem [shape: f32[16,1], index: 7, kind: input, shape index: {}]
  %s8 = inlined_call_operand.vmem [shape: f32[32,16], index: 8, kind: input, shape index: {}]
  %s9 = inlined_call_operand.vmem [shape: f32[32,1], index: 9, kind: input, shape index: {}]
  %s10 = inlined_call_operand.vmem [shape: f32[3,32], index: 10, kind: input, shape index: {}]
  %s11 = inlined_call_operand.vmem [shape: f32[3,1], index: 11, kind: input, shape index: {}]
  %s12 = inlined_call_operand.vmem [shape: f32[11,3], index: 12, kind: input, shape index: {}]
  %s13 = inlined_call_operand.vmem [shape: f32[11,1], index: 13, kind: input, shape index: {}]
  %s14 = inlined_call_operand.vmem [shape: f32[2,11,1024], index: 14, kind: output, shape index: {}]
  %s15 = sld [smem:[#allocation0]]
  $region112: #{tpu_custom_call.1} parent=0
    _
  %s17 = ssub.s32 1, %s15
  %s18 = scalar_select 0, %s17, %s15
  $region1: #{tpu_custom_call.1} parent=0
    #allocation2 [shape = 'u8[65536]{0}', space=vmem, size = 0x10000, scoped, tag = 'input window, operand 1']
    #allocation3 [shape = 's32[2]{0}', space=sflag, size = 0x8, scoped, tag = 'scoped memory for tpu_custom_call.1']
    #allocation4 [shape = 'u8[65536]{0}', space=vmem, size = 0x10000, scoped, tag = 'output window, operand 0']
    %19 = vsyncpa [#allocation3], 0
    %s20 = scalar_lea.sflag [#allocation3], 1
    %21 = vsyncpa %s20, 0
    loop: start=0, step=1, limit=6
    $region2: #{tpu_custom_call.1} parent=1 // loop_pre_header
      _
    $region3: #{tpu_custom_call.1} parent=1 // loop_header
      %s23 = sphi 0, %s27
      %p24 = scmp.ge.s32.totalorder %s23, 6
      %s30 = sphi 0, %s42
      %s31 = sphi 0, %s38
      %s32 = sphi 0, %s30
      %s33 = sphi 0, %s31
      %s34 = sphi 0, %s32
      %s35 = sphi 0, %s33
      %s49 = sphi 0, %s51
      %s52 = sphi 0, %s49
      %s53 = sphi 0, %s52
      %s69 = sphi 0, %s53
      %s79 = sphi 0, %s81
      %s82 = sphi 0, %s79
      %s83 = sphi 0, %s82
      %s99 = sphi 0, %s83
      %s103 = sphi 0, %s103
      %s105 = sphi 0, %s103
      %s106 = sphi 0, %s105
      %s120 = sphi 0, %s106
      %s124 = sphi 0, %s124
      %s126 = sphi 0, %s124
      %s127 = sphi 0, %s126
      %s141 = sphi 0, %s127
      %s145 = sphi 0, %s145
      %s147 = sphi 0, %s145
      %s148 = sphi 0, %s147
      %s162 = sphi 0, %s148
      %s166 = sphi 0, %s166
      %s168 = sphi 0, %s166
      %s169 = sphi 0, %s168
      %s183 = sphi 0, %s169
      %s187 = sphi 0, %s187
      %s189 = sphi 0, %s187
      %s190 = sphi 0, %s189
      %s204 = sphi 0, %s190
      %s208 = sphi 0, %s208
      %s210 = sphi 0, %s208
      %s211 = sphi 0, %s210
      %s225 = sphi 0, %s211
      %s229 = sphi 0, %s229
      %s231 = sphi 0, %s229
      %s232 = sphi 0, %s231
      %s246 = sphi 0, %s232
      %s250 = sphi 0, %s250
      %s252 = sphi 0, %s250
      %s253 = sphi 0, %s252
      %s267 = sphi 0, %s253
      %s271 = sphi 0, %s271
      %s273 = sphi 0, %s271
      %s274 = sphi 0, %s273
      %s288 = sphi 0, %s274
      %s292 = sphi 0, %s292
      %s294 = sphi 0, %s292
      %s295 = sphi 0, %s294
      %s309 = sphi 0, %s295
      %s313 = sphi 0, %s313
      %s315 = sphi 0, %s313
      %s316 = sphi 0, %s315
      %s330 = sphi 0, %s316
      %s334 = sphi 0, %s334
      %s336 = sphi 0, %s334
      %s337 = sphi 0, %s336
      %s351 = sphi 0, %s337
      %s359 = sphi 0, %s361
      %s362 = sphi 0, %s359
      %s363 = sphi 0, %s362
      %s379 = sphi 0, %s363
    $region4: #{tpu_custom_call.1} parent=1 // loop_header_branch
      %26 = sbr.rel (%p24) target = $region8
    $region5: #{tpu_custom_call.1} parent=1 // loop_body
      %s28 = ssub.s32 %s23, 1
      %s29 = ssub.s32 %s23, 2
      %s36 = sadd.s32 1, %s31
      %p37 = scmp.ge.s32.totalorder %s36, 2
      %s38 = scalar_select %p37, 0, %s36
      %s39 = sadd.s32 1, %s30
      %s40 = scalar_select %p37, %s39, %s30
      %p41 = scmp.ge.s32.totalorder %s40, 2
      %s42 = scalar_select %p41, 0, %s40
      %s43 = smul.u32 %s30, 2
      %s44 = sadd.s32 %s43, %s31
      %s45 = smul.u32 %s42, 2
      %s46 = sadd.s32 %s45, %s38
      %s47 = ssub.s32 %s44, %s46
      %p48 = scmp.eq.s32.totalorder %s47, 0
      %s50 = sadd.s32 %s49, 1
      %s51 = scalar_select %p48, %s49, %s50
      %p54 = pneg %p48
      %p55 = scmp.eq.s32.totalorder %s23, 3
      %p56 = por %p54, %p55
      %p57 = scmp.ne.s32.totalorder %s49, %s52
      %p58 = scmp.eq.s32.totalorder %s23, 0
      %p59 = por %p57, %p58
      %p60 = scmp.ne.s32.totalorder %s49, %s52
      %p61 = scmp.eq.s32.totalorder %s28, 3
      %p62 = por %p60, %p61
      %p63 = scmp.ne.s32.totalorder %s52, %s53
      %p64 = scmp.eq.s32.totalorder %s28, 0
      %p65 = por %p63, %p64
      %p66 = scmp.ne.s32.totalorder %s52, %s53
      %p67 = scmp.eq.s32.totalorder %s29, 3
      %p68 = por %p66, %p67
      %p70 = scmp.ne.s32.totalorder %s53, %s69
      %p71 = scmp.eq.s32.totalorder %s29, 0
      %p72 = por %p70, %p71
      %s73 = smul.u32 %s30, 2
      %s74 = sadd.s32 %s73, %s31
      %s75 = smul.u32 %s42, 2
      %s76 = sadd.s32 %s75, %s38
      %s77 = ssub.s32 %s74, %s76
      %p78 = scmp.eq.s32.totalorder %s77, 0
      %s80 = sadd.s32 %s79, 1
      %s81 = scalar_select %p78, %s79, %s80
      %p84 = pneg %p78
      %p85 = scmp.eq.s32.totalorder %s23, 3
      %p86 = por %p84, %p85
      %p87 = scmp.ne.s32.totalorder %s79, %s82
      %p88 = scmp.eq.s32.totalorder %s23, 0
      %p89 = por %p87, %p88
      %p90 = scmp.ne.s32.totalorder %s79, %s82
      %p91 = scmp.eq.s32.totalorder %s28, 3
      %p92 = por %p90, %p91
      %p93 = scmp.ne.s32.totalorder %s82, %s83
      %p94 = scmp.eq.s32.totalorder %s28, 0
      %p95 = por %p93, %p94
      %p96 = scmp.ne.s32.totalorder %s82, %s83
      %p97 = scmp.eq.s32.totalorder %s29, 3
      %p98 = por %p96, %p97
      %p100 = scmp.ne.s32.totalorder %s83, %s99
      %p101 = scmp.eq.s32.totalorder %s29, 0
      %p102 = por %p100, %p101
      %s104 = sadd.s32 %s103, 1
      %p107 = scmp.eq.s32.totalorder %s23, 3
      %p108 = scmp.ne.s32.totalorder %s103, %s105
      %p109 = scmp.eq.s32.totalorder %s23, 0
      %p110 = por %p108, %p109
      %p111 = scmp.ne.s32.totalorder %s103, %s105
      %p112 = scmp.eq.s32.totalorder %s28, 3
      %p113 = por %p111, %p112
      %p114 = scmp.ne.s32.totalorder %s105, %s106
      %p115 = scmp.eq.s32.totalorder %s28, 0
      %p116 = por %p114, %p115
      %p117 = scmp.ne.s32.totalorder %s105, %s106
      %p118 = scmp.eq.s32.totalorder %s29, 3
      %p119 = por %p117, %p118
      %p121 = scmp.ne.s32.totalorder %s106, %s120
      %p122 = scmp.eq.s32.totalorder %s29, 0
      %p123 = por %p121, %p122
      %s125 = sadd.s32 %s124, 1
      %p128 = scmp.eq.s32.totalorder %s23, 3
      %p129 = scmp.ne.s32.totalorder %s124, %s126
      %p130 = scmp.eq.s32.totalorder %s23, 0
      %p131 = por %p129, %p130
      %p132 = scmp.ne.s32.totalorder %s124, %s126
      %p133 = scmp.eq.s32.totalorder %s28, 3
      %p134 = por %p132, %p133
      %p135 = scmp.ne.s32.totalorder %s126, %s127
      %p136 = scmp.eq.s32.totalorder %s28, 0
      %p137 = por %p135, %p136
      %p138 = scmp.ne.s32.totalorder %s126, %s127
      %p139 = scmp.eq.s32.totalorder %s29, 3
      %p140 = por %p138, %p139
      %p142 = scmp.ne.s32.totalorder %s127, %s141
      %p143 = scmp.eq.s32.totalorder %s29, 0
      %p144 = por %p142, %p143
      %s146 = sadd.s32 %s145, 1
      %p149 = scmp.eq.s32.totalorder %s23, 3
      %p150 = scmp.ne.s32.totalorder %s145, %s147
      %p151 = scmp.eq.s32.totalorder %s23, 0
      %p152 = por %p150, %p151
      %p153 = scmp.ne.s32.totalorder %s145, %s147
      %p154 = scmp.eq.s32.totalorder %s28, 3
      %p155 = por %p153, %p154
      %p156 = scmp.ne.s32.totalorder %s147, %s148
      %p157 = scmp.eq.s32.totalorder %s28, 0
      %p158 = por %p156, %p157
      %p159 = scmp.ne.s32.totalorder %s147, %s148
      %p160 = scmp.eq.s32.totalorder %s29, 3
      %p161 = por %p159, %p160
      %p163 = scmp.ne.s32.totalorder %s148, %s162
      %p164 = scmp.eq.s32.totalorder %s29, 0
      %p165 = por %p163, %p164
      %s167 = sadd.s32 %s166, 1
      %p170 = scmp.eq.s32.totalorder %s23, 3
      %p171 = scmp.ne.s32.totalorder %s166, %s168
      %p172 = scmp.eq.s32.totalorder %s23, 0
      %p173 = por %p171, %p172
      %p174 = scmp.ne.s32.totalorder %s166, %s168
      %p175 = scmp.eq.s32.totalorder %s28, 3
      %p176 = por %p174, %p175
      %p177 = scmp.ne.s32.totalorder %s168, %s169
      %p178 = scmp.eq.s32.totalorder %s28, 0
      %p179 = por %p177, %p178
      %p180 = scmp.ne.s32.totalorder %s168, %s169
      %p181 = scmp.eq.s32.totalorder %s29, 3
      %p182 = por %p180, %p181
      %p184 = scmp.ne.s32.totalorder %s169, %s183
      %p185 = scmp.eq.s32.totalorder %s29, 0
      %p186 = por %p184, %p185
      %s188 = sadd.s32 %s187, 1
      %p191 = scmp.eq.s32.totalorder %s23, 3
      %p192 = scmp.ne.s32.totalorder %s187, %s189
      %p193 = scmp.eq.s32.totalorder %s23, 0
      %p194 = por %p192, %p193
      %p195 = scmp.ne.s32.totalorder %s187, %s189
      %p196 = scmp.eq.s32.totalorder %s28, 3
      %p197 = por %p195, %p196
      %p198 = scmp.ne.s32.totalorder %s189, %s190
      %p199 = scmp.eq.s32.totalorder %s28, 0
      %p200 = por %p198, %p199
      %p201 = scmp.ne.s32.totalorder %s189, %s190
      %p202 = scmp.eq.s32.totalorder %s29, 3
      %p203 = por %p201, %p202
      %p205 = scmp.ne.s32.totalorder %s190, %s204
      %p206 = scmp.eq.s32.totalorder %s29, 0
      %p207 = por %p205, %p206
      %s209 = sadd.s32 %s208, 1
      %p212 = scmp.eq.s32.totalorder %s23, 3
      %p213 = scmp.ne.s32.totalorder %s208, %s210
      %p214 = scmp.eq.s32.totalorder %s23, 0
      %p215 = por %p213, %p214
      %p216 = scmp.ne.s32.totalorder %s208, %s210
      %p217 = scmp.eq.s32.totalorder %s28, 3
      %p218 = por %p216, %p217
      %p219 = scmp.ne.s32.totalorder %s210, %s211
      %p220 = scmp.eq.s32.totalorder %s28, 0
      %p221 = por %p219, %p220
      %p222 = scmp.ne.s32.totalorder %s210, %s211
      %p223 = scmp.eq.s32.totalorder %s29, 3
      %p224 = por %p222, %p223
      %p226 = scmp.ne.s32.totalorder %s211, %s225
      %p227 = scmp.eq.s32.totalorder %s29, 0
      %p228 = por %p226, %p227
      %s230 = sadd.s32 %s229, 1
      %p233 = scmp.eq.s32.totalorder %s23, 3
      %p234 = scmp.ne.s32.totalorder %s229, %s231
      %p235 = scmp.eq.s32.totalorder %s23, 0
      %p236 = por %p234, %p235
      %p237 = scmp.ne.s32.totalorder %s229, %s231
      %p238 = scmp.eq.s32.totalorder %s28, 3
      %p239 = por %p237, %p238
      %p240 = scmp.ne.s32.totalorder %s231, %s232
      %p241 = scmp.eq.s32.totalorder %s28, 0
      %p242 = por %p240, %p241
      %p243 = scmp.ne.s32.totalorder %s231, %s232
      %p244 = scmp.eq.s32.totalorder %s29, 3
      %p245 = por %p243, %p244
      %p247 = scmp.ne.s32.totalorder %s232, %s246
      %p248 = scmp.eq.s32.totalorder %s29, 0
      %p249 = por %p247, %p248
      %s251 = sadd.s32 %s250, 1
      %p254 = scmp.eq.s32.totalorder %s23, 3
      %p255 = scmp.ne.s32.totalorder %s250, %s252
      %p256 = scmp.eq.s32.totalorder %s23, 0
      %p257 = por %p255, %p256
      %p258 = scmp.ne.s32.totalorder %s250, %s252
      %p259 = scmp.eq.s32.totalorder %s28, 3
      %p260 = por %p258, %p259
      %p261 = scmp.ne.s32.totalorder %s252, %s253
      %p262 = scmp.eq.s32.totalorder %s28, 0
      %p263 = por %p261, %p262
      %p264 = scmp.ne.s32.totalorder %s252, %s253
      %p265 = scmp.eq.s32.totalorder %s29, 3
      %p266 = por %p264, %p265
      %p268 = scmp.ne.s32.totalorder %s253, %s267
      %p269 = scmp.eq.s32.totalorder %s29, 0
      %p270 = por %p268, %p269
      %s272 = sadd.s32 %s271, 1
      %p275 = scmp.eq.s32.totalorder %s23, 3
      %p276 = scmp.ne.s32.totalorder %s271, %s273
      %p277 = scmp.eq.s32.totalorder %s23, 0
      %p278 = por %p276, %p277
      %p279 = scmp.ne.s32.totalorder %s271, %s273
      %p280 = scmp.eq.s32.totalorder %s28, 3
      %p281 = por %p279, %p280
      %p282 = scmp.ne.s32.totalorder %s273, %s274
      %p283 = scmp.eq.s32.totalorder %s28, 0
      %p284 = por %p282, %p283
      %p285 = scmp.ne.s32.totalorder %s273, %s274
      %p286 = scmp.eq.s32.totalorder %s29, 3
      %p287 = por %p285, %p286
      %p289 = scmp.ne.s32.totalorder %s274, %s288
      %p290 = scmp.eq.s32.totalorder %s29, 0
      %p291 = por %p289, %p290
      %s293 = sadd.s32 %s292, 1
      %p296 = scmp.eq.s32.totalorder %s23, 3
      %p297 = scmp.ne.s32.totalorder %s292, %s294
      %p298 = scmp.eq.s32.totalorder %s23, 0
      %p299 = por %p297, %p298
      %p300 = scmp.ne.s32.totalorder %s292, %s294
      %p301 = scmp.eq.s32.totalorder %s28, 3
      %p302 = por %p300, %p301
      %p303 = scmp.ne.s32.totalorder %s294, %s295
      %p304 = scmp.eq.s32.totalorder %s28, 0
      %p305 = por %p303, %p304
      %p306 = scmp.ne.s32.totalorder %s294, %s295
      %p307 = scmp.eq.s32.totalorder %s29, 3
      %p308 = por %p306, %p307
      %p310 = scmp.ne.s32.totalorder %s295, %s309
      %p311 = scmp.eq.s32.totalorder %s29, 0
      %p312 = por %p310, %p311
      %s314 = sadd.s32 %s313, 1
      %p317 = scmp.eq.s32.totalorder %s23, 3
      %p318 = scmp.ne.s32.totalorder %s313, %s315
      %p319 = scmp.eq.s32.totalorder %s23, 0
      %p320 = por %p318, %p319
      %p321 = scmp.ne.s32.totalorder %s313, %s315
      %p322 = scmp.eq.s32.totalorder %s28, 3
      %p323 = por %p321, %p322
      %p324 = scmp.ne.s32.totalorder %s315, %s316
      %p325 = scmp.eq.s32.totalorder %s28, 0
      %p326 = por %p324, %p325
      %p327 = scmp.ne.s32.totalorder %s315, %s316
      %p328 = scmp.eq.s32.totalorder %s29, 3
      %p329 = por %p327, %p328
      %p331 = scmp.ne.s32.totalorder %s316, %s330
      %p332 = scmp.eq.s32.totalorder %s29, 0
      %p333 = por %p331, %p332
      %s335 = sadd.s32 %s334, 1
      %p338 = scmp.eq.s32.totalorder %s23, 3
      %p339 = scmp.ne.s32.totalorder %s334, %s336
      %p340 = scmp.eq.s32.totalorder %s23, 0
      %p341 = por %p339, %p340
      %p342 = scmp.ne.s32.totalorder %s334, %s336
      %p343 = scmp.eq.s32.totalorder %s28, 3
      %p344 = por %p342, %p343
      %p345 = scmp.ne.s32.totalorder %s336, %s337
      %p346 = scmp.eq.s32.totalorder %s28, 0
      %p347 = por %p345, %p346
      %p348 = scmp.ne.s32.totalorder %s336, %s337
      %p349 = scmp.eq.s32.totalorder %s29, 3
      %p350 = por %p348, %p349
      %p352 = scmp.ne.s32.totalorder %s337, %s351
      %p353 = scmp.eq.s32.totalorder %s29, 0
      %p354 = por %p352, %p353
      %s355 = ssub.s32 %s30, %s42
      %s356 = ssub.s32 %s31, %s38
      %s357 = sor.u32 %s355, %s356
      %p358 = scmp.eq.s32.totalorder %s357, 0
      %s360 = sadd.s32 %s359, 1
      %s361 = scalar_select %p358, %s359, %s360
      %p364 = pneg %p358
      %p365 = scmp.eq.s32.totalorder %s23, 3
      %p366 = por %p364, %p365
      %p367 = scmp.ne.s32.totalorder %s359, %s362
      %p368 = scmp.eq.s32.totalorder %s23, 0
      %p369 = por %p367, %p368
      %p370 = scmp.ne.s32.totalorder %s359, %s362
      %p371 = scmp.eq.s32.totalorder %s28, 3
      %p372 = por %p370, %p371
      %p373 = scmp.ne.s32.totalorder %s362, %s363
      %p374 = scmp.eq.s32.totalorder %s28, 0
      %p375 = por %p373, %p374
      %p376 = scmp.ne.s32.totalorder %s362, %s363
      %p377 = scmp.eq.s32.totalorder %s29, 3
      %p378 = por %p376, %p377
      %p380 = scmp.ne.s32.totalorder %s363, %s379
      %p381 = scmp.eq.s32.totalorder %s29, 0
      %p382 = por %p380, %p381
      %p383 = scmp.le.s32.totalorder 1, %s23
      %p384 = scmp.lt.s32.totalorder %s23, 5
      %p385 = pnand %p383, %p384
      %p386 = pneg %p385
      // Predicated region
      $region9: #{tpu_custom_call.1} parent=5 // pred_check
        _
      $region10: #{tpu_custom_call.1} parent=5 // pred_check_branch
        %388 = sbr.rel (%p385) target = $region12
      $region11: #{tpu_custom_call.1} parent=5 // pred_region
        %s389 = ssub.s32 %s23, 1
        // Predicated region
        $region13: #{tpu_custom_call.1} parent=11 // pred_check
          %p390 = pneg %p116
        $region14: #{tpu_custom_call.1} parent=11 // pred_check_branch
          %392 = sbr.rel (%p390) target = $region16
        $region15: #{tpu_custom_call.1} parent=11 // pred_region
          _
        $region16: #{tpu_custom_call.1} parent=11 // pred_fallthru
          _
        // Predicated region
        $region17: #{tpu_custom_call.1} parent=11 // pred_check
          %p393 = pneg %p137
        $region18: #{tpu_custom_call.1} parent=11 // pred_check_branch
          %395 = sbr.rel (%p393) target = $region20
        $region19: #{tpu_custom_call.1} parent=11 // pred_region
          _
        $region20: #{tpu_custom_call.1} parent=11 // pred_fallthru
          _
        // Predicated region
        $region21: #{tpu_custom_call.1} parent=11 // pred_check
          %p396 = pneg %p158
        $region22: #{tpu_custom_call.1} parent=11 // pred_check_branch
          %398 = sbr.rel (%p396) target = $region24
        $region23: #{tpu_custom_call.1} parent=11 // pred_region
          _
        $region24: #{tpu_custom_call.1} parent=11 // pred_fallthru
          _
        // Predicated region
        $region25: #{tpu_custom_call.1} parent=11 // pred_check
          %p399 = pneg %p179
        $region26: #{tpu_custom_call.1} parent=11 // pred_check_branch
          %401 = sbr.rel (%p399) target = $region28
        $region27: #{tpu_custom_call.1} parent=11 // pred_region
          _
        $region28: #{tpu_custom_call.1} parent=11 // pred_fallthru
          _
        // Predicated region
        $region29: #{tpu_custom_call.1} parent=11 // pred_check
          %p402 = pneg %p200
        $region30: #{tpu_custom_call.1} parent=11 // pred_check_branch
          %404 = sbr.rel (%p402) target = $region32
        $region31: #{tpu_custom_call.1} parent=11 // pred_region
          _
        $region32: #{tpu_custom_call.1} parent=11 // pred_fallthru
          _
        // Predicated region
        $region33: #{tpu_custom_call.1} parent=11 // pred_check
          %p405 = pneg %p221
        $region34: #{tpu_custom_call.1} parent=11 // pred_check_branch
          %407 = sbr.rel (%p405) target = $region36
        $region35: #{tpu_custom_call.1} parent=11 // pred_region
          _
        $region36: #{tpu_custom_call.1} parent=11 // pred_fallthru
          _
        // Predicated region
        $region37: #{tpu_custom_call.1} parent=11 // pred_check
          %p408 = pneg %p242
        $region38: #{tpu_custom_call.1} parent=11 // pred_check_branch
          %410 = sbr.rel (%p408) target = $region40
        $region39: #{tpu_custom_call.1} parent=11 // pred_region
          _
        $region40: #{tpu_custom_call.1} parent=11 // pred_fallthru
          _
        // Predicated region
        $region41: #{tpu_custom_call.1} parent=11 // pred_check
          %p411 = pneg %p263
        $region42: #{tpu_custom_call.1} parent=11 // pred_check_branch
          %413 = sbr.rel (%p411) target = $region44
        $region43: #{tpu_custom_call.1} parent=11 // pred_region
          _
        $region44: #{tpu_custom_call.1} parent=11 // pred_fallthru
          _
        // Predicated region
        $region45: #{tpu_custom_call.1} parent=11 // pred_check
          %p414 = pneg %p284
        $region46: #{tpu_custom_call.1} parent=11 // pred_check_branch
          %416 = sbr.rel (%p414) target = $region48
        $region47: #{tpu_custom_call.1} parent=11 // pred_region
          _
        $region48: #{tpu_custom_call.1} parent=11 // pred_fallthru
          _
        // Predicated region
        $region49: #{tpu_custom_call.1} parent=11 // pred_check
          %p417 = pneg %p305
        $region50: #{tpu_custom_call.1} parent=11 // pred_check_branch
          %419 = sbr.rel (%p417) target = $region52
        $region51: #{tpu_custom_call.1} parent=11 // pred_region
          _
        $region52: #{tpu_custom_call.1} parent=11 // pred_fallthru
          _
        // Predicated region
        $region53: #{tpu_custom_call.1} parent=11 // pred_check
          %p420 = pneg %p326
        $region54: #{tpu_custom_call.1} parent=11 // pred_check_branch
          %422 = sbr.rel (%p420) target = $region56
        $region55: #{tpu_custom_call.1} parent=11 // pred_region
          _
        $region56: #{tpu_custom_call.1} parent=11 // pred_fallthru
          _
        // Predicated region
        $region57: #{tpu_custom_call.1} parent=11 // pred_check
          %p423 = pneg %p347
        $region58: #{tpu_custom_call.1} parent=11 // pred_check_branch
          %425 = sbr.rel (%p423) target = $region60
        $region59: #{tpu_custom_call.1} parent=11 // pred_region
          _
        $region60: #{tpu_custom_call.1} parent=11 // pred_fallthru
          _
      $region12: #{tpu_custom_call.1} parent=5 // pred_fallthru
        _
      %p426 = scmp.lt.s32.totalorder %s23, 4
      // Predicated region
      $region61: #{tpu_custom_call.1} parent=5 // pred_check
        %p427 = pneg %p426
      $region62: #{tpu_custom_call.1} parent=5 // pred_check_branch
        %429 = sbr.rel (%p427) target = $region64
      $region63: #{tpu_custom_call.1} parent=5 // pred_region
        // Predicated region
        $region65: #{tpu_custom_call.1} parent=63 // pred_check
          %p430 = pneg %p59
        $region66: #{tpu_custom_call.1} parent=63 // pred_check_branch
          %432 = sbr.rel (%p430) target = $region68
        $region67: #{tpu_custom_call.1} parent=63 // pred_region
          %s433 = smul.u32 %s30, 2
          %s434 = sadd.s32 %s433, %s31
          %s435 = smul.u32 4, %s434
          %p436 = scmp.lt.s32.totalorder %s435, 15
          %s437 = scalar_select %p436, %s435, 15
          %s438 = scalar_lea.vmem %s0, %s437
          %s439 = smul.u32 %s30, 2
          %s440 = sadd.s32 %s439, %s31
          %s441 = smul.u32 4, %s440
        $region68: #{tpu_custom_call.1} parent=63 // pred_fallthru
          _
        // Predicated region
        $region69: #{tpu_custom_call.1} parent=63 // pred_check
          %p442 = pneg %p89
        $region70: #{tpu_custom_call.1} parent=63 // pred_check_branch
          %444 = sbr.rel (%p442) target = $region72
        $region71: #{tpu_custom_call.1} parent=63 // pred_region
          %s445 = sand.u32 %s79, 1
          %s446 = scalar_lea.sflag [#allocation3], %s445
          %s447 = sand.u32 %s79, 1
          %s448 = smul.addr %s447, 64
          %s449 = scalar_lea.vmem [#allocation2], %s448
          %s450 = smul.u32 %s30, 2
          %s451 = sadd.s32 %s450, %s31
          %s452 = smul.u32 4, %s451
          %s454 = ssub.s32 1024, 1024
          %455 = vsyncadd %s446, %s454
          %s456 = smul.addr %s452, 128
          %s457 = scalar_lea.hbm %s1, %s456
          %s458 = sshll.u32 %s449, 4
          %s459 = int_to_ptr.vmem [resolvable:$true] %s458
          %464 = dma.hbm_to_vmem [thread:$0]  %s457, 1024, %s459, %s446, 2048, 512, 32
        $region72: #{tpu_custom_call.1} parent=63 // pred_fallthru
          _
      $region64: #{tpu_custom_call.1} parent=5 // pred_fallthru
        _
      %p465 = scmp.le.s32.totalorder 1, %s23
      %p466 = scmp.lt.s32.totalorder %s23, 5
      %p467 = pnand %p465, %p466
      %p468 = pneg %p467
      // Predicated region
      $region73: #{tpu_custom_call.1} parent=5 // pred_check
        _
      $region74: #{tpu_custom_call.1} parent=5 // pred_check_branch
        %470 = sbr.rel (%p467) target = $region76
      $region75: #{tpu_custom_call.1} parent=5 // pred_region
        %s471 = ssub.s32 %s23, 1
        %s472 = sand.u32 %s82, 1
        %s473 = scalar_lea.sflag [#allocation3], %s472
        %s474 = sand.u32 %s82, 1
        %s475 = smul.addr %s474, 64
        %s476 = scalar_lea.vmem [#allocation2], %s475
        // Predicated region
        $region77: #{tpu_custom_call.1} parent=75 // pred_check
          %p477 = pneg %p95
        $region78: #{tpu_custom_call.1} parent=75 // pred_check_branch
          %479 = sbr.rel (%p477) target = $region80
        $region79: #{tpu_custom_call.1} parent=75 // pred_region
          %480 = dma.done %s473, 1024
        $region80: #{tpu_custom_call.1} parent=75 // pred_fallthru
          _
        %s481 = smul.u32 %s32, 2
        %s482 = sadd.s32 %s481, %s33
        %s483 = smul.u32 4, %s482
        %p484 = scmp.lt.s32.totalorder %s483, 15
        %s485 = scalar_select %p484, %s483, 15
        %s486 = scalar_lea.vmem %s0, %s485
        %p487 = pneg %p65
        %p488 = pneg %p62
        %s489 = sand.u32 %s82, 1
        %s490 = scalar_lea.sflag [#allocation3], %s489
        %s491 = sand.u32 %s82, 1
        %s492 = smul.addr %s491, 64
        %s493 = scalar_lea.vmem [#allocation2], %s492
        %p494 = pneg %p95
        %p495 = pneg %p92
        %p496 = pneg %p116
        %p497 = pneg %p113
        %p498 = pneg %p137
        %p499 = pneg %p134
        %p500 = pneg %p158
        %p501 = pneg %p155
        %p502 = pneg %p179
        %p503 = pneg %p176
        %p504 = pneg %p200
        %p505 = pneg %p197
        %p506 = pneg %p221
        %p507 = pneg %p218
        %p508 = pneg %p242
        %p509 = pneg %p239
        %p510 = pneg %p263
        %p511 = pneg %p260
        %p512 = pneg %p284
        %p513 = pneg %p281
        %p514 = pneg %p305
        %p515 = pneg %p302
        %p516 = pneg %p326
        %p517 = pneg %p323
        %p518 = pneg %p347
        %p519 = pneg %p344
        %p520 = pneg %p375
        %p521 = pneg %p372
        %s522 = sand.u32 %s362, 1
        %s523 = sand.u32 %s362, 1
        %s524 = smul.addr %s523, 64
        %s525 = scalar_lea.vmem [#allocation4], %s524
        %s526 = smul.u32 %s32, 2
        %s527 = sadd.s32 %s526, %s33
        %s528 = smul.u32 4, %s527
        %p529 = scmp.lt.s32.totalorder %s528, 15
        %s530 = scalar_select %p529, %s528, 15
        %s531 = scalar_lea.vmem %s0, %s530
        %s532 = smul.u32 %s32, 2
        %s533 = sadd.s32 %s532, %s33
        %s534 = smul.u32 4, %s533
        %s535 = smul.u32 %s32, 2
        %s536 = sadd.s32 %s535, %s33
        %s537 = smul.u32 4, %s536
        %s538 = smul.u32 4, %s33
        %v539 = vld [vmem:[%s531] sm:$0xf]
        %v540 = vlaneseq
        %v541 = vshrl.u32 %v540, 7
        %v542 = vadd.s32 %v541, 8
        %v543 = vlaneseq
        %v544 = vshrl.u32 %v543, 7
        %v545 = vsub.s32 0, %v544
        %v546 = vrot.slane %v539, %v545
        %v547 = vlaneseq
        %v548 = vshrl.u32 %v547, 7
        %v549 = vsub.s32 1, %v548
        %v550 = vrot.slane %v539, %v549
        %v551 = vlaneseq
        %v552 = vshrl.u32 %v551, 7
        %v553 = vsub.s32 2, %v552
        %v554 = vrot.slane %v539, %v553
        %v555 = vlaneseq
        %v556 = vshrl.u32 %v555, 7
        %v557 = vsub.s32 3, %v556
        %v558 = vrot.slane %v539, %v557
        %vm559 = vcmp.eq.s32.totalorder %v541, %v546
        %vm560 = vcmp.eq.s32.totalorder %v541, %v550
        %vm561 = vcmp.eq.s32.totalorder %v541, %v554
        %vm562 = vcmp.eq.s32.totalorder %v541, %v558
        %vm563 = vcmp.eq.s32.totalorder %v542, %v546
        %vm564 = vcmp.eq.s32.totalorder %v542, %v550
        %vm565 = vcmp.eq.s32.totalorder %v542, %v554
        %vm566 = vcmp.eq.s32.totalorder %v542, %v558
        %v567 = vsel %vm559, 1, 0
        %v568 = vsel %vm560, 1, 0
        %v569 = vsel %vm561, 1, 0
        %v570 = vsel %vm562, 1, 0
        %v571 = vsel %vm563, 1, 0
        %v572 = vsel %vm564, 1, 0
        %v573 = vsel %vm565, 1, 0
        %v574 = vsel %vm566, 1, 0
        %v575 = vcvt.s32.f32 %v567
        %v576 = vcvt.s32.f32 %v568
        %v577 = vcvt.s32.f32 %v569
        %v578 = vcvt.s32.f32 %v570
        %v579 = vcvt.s32.f32 %v571
        %v580 = vcvt.s32.f32 %v572
        %v581 = vcvt.s32.f32 %v573
        %v582 = vcvt.s32.f32 %v574
        %v583 = vld [vmem:[%s2] sm:$0xff]
        %v584 = vld [vmem:[%s2 + $0x8] sm:$0xff]
        %v585 = vld [vmem:[%s2 + $0x10] sm:$0xff]
        %v586 = vld [vmem:[%s2 + $0x18] sm:$0xff]
        %v587 = vld [vmem:[%s3] sm:$0xff]
        %v588 = vld [vmem:[%s3 + $0x8] sm:$0xff]
        %v589 = vld [vmem:[%s3 + $0x10] sm:$0xff]
        %v590 = vld [vmem:[%s3 + $0x18] sm:$0xff]
        %592 = vset.pattern.permute.xlu0 0
        %593 = vperm.xlu0 %592, %v587
        %v594 = vpop.permute.xlu0 %593
        %597 = vset.pattern.permute.xlu0 0
        %598 = vperm.xlu0 %597, %v588
        %v599 = vpop.permute.xlu0 %598
        %602 = vset.pattern.permute.xlu0 0
        %603 = vperm.xlu0 %602, %v589
        %v604 = vpop.permute.xlu0 %603
        %607 = vset.pattern.permute.xlu0 0
        %608 = vperm.xlu0 %607, %v590
        %v609 = vpop.permute.xlu0 %608
        %vm611 = vcmask 89088
        %v613 = vsel %vm611, %v583, 0
        %v616 = vsel %vm611, %v584, 0
        %v619 = vsel %vm611, %v585, 0
        %v622 = vsel %vm611, %v586, 0
        %vm624 = vcmask 1042432
        %v626 = vsel %vm624, %v579, 0
        %v629 = vsel %vm624, %v580, 0
        %v632 = vsel %vm624, %v581, 0
        %v635 = vsel %vm624, %v582, 0
        %637 = vmatprep.subr.mxu0 %v576
        %638 = vmatpush1.msra.mxu0 %v575
        %639 = vmatprep.subr.mxu0 %v629
        %640 = vmatpush1.msra.mxu0 %v626
        %641 = vmatprep.subr.mxu0 0.0
        %642 = vmatpush1.msra.mxu0 0.0
        %643 = vmatprep.subr.mxu0 0.0
        %644 = vmatpush1.msra.mxu0 0.0
        %645 = vmatprep.subr.mxu0 0.0
        %646 = vmatpush1.msra.mxu0 0.0
        %647 = vmatprep.subr.mxu0 0.0
        %648 = vmatpush1.msra.mxu0 0.0
        %649 = vmatprep.subr.mxu0 0.0
        %650 = vmatpush1.msra.mxu0 0.0
        %651 = vmatprep.subr.mxu0 0.0
        %652 = vmatpush1.msra.mxu0 0.0
        %653 = vmatprep.subr.mxu0 0.0
        %654 = vmatpush1.msra.mxu0 0.0
        %655 = vmatprep.subr.mxu0 0.0
        %656 = vmatpush1.msra.mxu0 0.0
        %657 = vmatprep.subr.mxu0 0.0
        %658 = vmatpush1.msra.mxu0 0.0
        %659 = vmatprep.subr.mxu0 0.0
        %660 = vmatpush1.msra.mxu0 0.0
        %661 = vmatprep.subr.mxu0 0.0
        %662 = vmatpush1.msra.mxu0 0.0
        %663 = vmatprep.subr.mxu0 0.0
        %664 = vmatpush1.msra.mxu0 0.0
        %665 = vmatprep.subr.mxu0 0.0
        %666 = vmatpush1.msra.mxu0 0.0
        %667 = vmatprep.subr.mxu0 0.0
        %668 = vmatpush1.msra.mxu0 0.0
        %669 = vmatprep.subr.mxu0 0.0
        %670 = vmatpush1.msra.mxu0 0.0
        %671 = vmatprep.subr.mxu0 0.0
        %672 = vmatpush1.msra.mxu0 0.0
        %673 = vmatprep.subr.mxu0 0.0
        %674 = vmatpush1.msra.mxu0 0.0
        %675 = vmatprep.subr.mxu0 0.0
        %676 = vmatpush1.msra.mxu0 0.0
        %677 = vmatprep.subr.mxu0 0.0
        %678 = vmatpush1.msra.mxu0 0.0
        %679 = vmatprep.subr.mxu0 0.0
        %680 = vmatpush1.msra.mxu0 0.0
        %681 = vmatprep.subr.mxu0 0.0
        %682 = vmatpush1.msra.mxu0 0.0
        %683 = vmatprep.subr.mxu0 0.0
        %684 = vmatpush1.msra.mxu0 0.0
        %685 = vmatprep.subr.mxu0 0.0
        %686 = vmatpush1.msra.mxu0 0.0
        %687 = vmatprep.subr.mxu0 0.0
        %688 = vmatpush1.msra.mxu0 0.0
        %689 = vmatprep.subr.mxu0 0.0
        %690 = vmatpush1.msra.mxu0 0.0
        %691 = vmatprep.subr.mxu0 0.0
        %692 = vmatpush1.msra.mxu0 0.0
        %693 = vmatprep.subr.mxu0 0.0
        %694 = vmatpush1.msra.mxu0 0.0
        %695 = vmatprep.subr.mxu0 0.0
        %696 = vmatpush1.msra.mxu0 0.0
        %697 = vmatprep.subr.mxu0 0.0
        %698 = vmatpush1.msra.mxu0 0.0
        %699 = vmatprep.subr.mxu0 0.0
        %700 = vmatpush1.msra.mxu0 0.0
        %701 = vmatprep.mubr.f32.mxu0 0.0
        %702 = vmatmul.mubr.f32.gmra.mrb[0].mxu0 %v613
        %v703 = vpop.f32.mrb[0].mxu0
        %v704 = vadd.f32 %v594, %v703
        %v705 = vpop.f32.mrb[0].mxu0
        %v706 = vadd.f32 %v594, %v705
        %707 = vmatprep.mubr.f32.mxu0 0.0
        %708 = vmatmul.mubr.f32.gmra.mrb[0].mxu0 %v616
        %v709 = vpop.f32.mrb[0].mxu0
        %v710 = vadd.f32 %v599, %v709
        %v711 = vpop.f32.mrb[0].mxu0
        %v712 = vadd.f32 %v599, %v711
        %713 = vmatprep.mubr.f32.mxu0 0.0
        %714 = vmatmul.mubr.f32.gmra.mrb[0].mxu0 %v619
        %v715 = vpop.f32.mrb[0].mxu0
        %v716 = vadd.f32 %v604, %v715
        %v717 = vpop.f32.mrb[0].mxu0
        %v718 = vadd.f32 %v604, %v717
        %719 = vmatprep.mubr.f32.mxu0 0.0
        %720 = vmatmul.mubr.f32.gmra.mrb[0].mxu0 %v622
        %v721 = vpop.f32.mrb[0].mxu0
        %v722 = vadd.f32 %v609, %v721
        %v723 = vpop.f32.mrb[0].mxu0
        %v724 = vadd.f32 %v609, %v723
        %725 = vdwg.mxu0
        %726 = vmatprep.subr.mxu0 %v578
        %727 = vmatpush1.msra.mxu0 %v577
        %728 = vmatprep.subr.mxu0 %v635
        %729 = vmatpush1.msra.mxu0 %v632
        %730 = vmatprep.subr.mxu0 0.0
        %731 = vmatpush1.msra.mxu0 0.0
        %732 = vmatprep.subr.mxu0 0.0
        %733 = vmatpush1.msra.mxu0 0.0
        %734 = vmatprep.subr.mxu0 0.0
        %735 = vmatpush1.msra.mxu0 0.0
        %736 = vmatprep.subr.mxu0 0.0
        %737 = vmatpush1.msra.mxu0 0.0
        %738 = vmatprep.subr.mxu0 0.0
        %739 = vmatpush1.msra.mxu0 0.0
        %740 = vmatprep.subr.mxu0 0.0
        %741 = vmatpush1.msra.mxu0 0.0
        %742 = vmatprep.subr.mxu0 0.0
        %743 = vmatpush1.msra.mxu0 0.0
        %744 = vmatprep.subr.mxu0 0.0
        %745 = vmatpush1.msra.mxu0 0.0
        %746 = vmatprep.subr.mxu0 0.0
        %747 = vmatpush1.msra.mxu0 0.0
        %748 = vmatprep.subr.mxu0 0.0
        %749 = vmatpush1.msra.mxu0 0.0
        %750 = vmatprep.subr.mxu0 0.0
        %751 = vmatpush1.msra.mxu0 0.0
        %752 = vmatprep.subr.mxu0 0.0
        %753 = vmatpush1.msra.mxu0 0.0
        %754 = vmatprep.subr.mxu0 0.0
        %755 = vmatpush1.msra.mxu0 0.0
        %756 = vmatprep.subr.mxu0 0.0
        %757 = vmatpush1.msra.mxu0 0.0
        %758 = vmatprep.subr.mxu0 0.0
        %759 = vmatpush1.msra.mxu0 0.0
        %760 = vmatprep.subr.mxu0 0.0
        %761 = vmatpush1.msra.mxu0 0.0
        %762 = vmatprep.subr.mxu0 0.0
        %763 = vmatpush1.msra.mxu0 0.0
        %764 = vmatprep.subr.mxu0 0.0
        %765 = vmatpush1.msra.mxu0 0.0
        %766 = vmatprep.subr.mxu0 0.0
        %767 = vmatpush1.msra.mxu0 0.0
        %768 = vmatprep.subr.mxu0 0.0
        %769 = vmatpush1.msra.mxu0 0.0
        %770 = vmatprep.subr.mxu0 0.0
        %771 = vmatpush1.msra.mxu0 0.0
        %772 = vmatprep.subr.mxu0 0.0
        %773 = vmatpush1.msra.mxu0 0.0
        %774 = vmatprep.subr.mxu0 0.0
        %775 = vmatpush1.msra.mxu0 0.0
        %776 = vmatprep.subr.mxu0 0.0
        %777 = vmatpush1.msra.mxu0 0.0
        %778 = vmatprep.subr.mxu0 0.0
        %779 = vmatpush1.msra.mxu0 0.0
        %780 = vmatprep.subr.mxu0 0.0
        %781 = vmatpush1.msra.mxu0 0.0
        %782 = vmatprep.subr.mxu0 0.0
        %783 = vmatpush1.msra.mxu0 0.0
        %784 = vmatprep.subr.mxu0 0.0
        %785 = vmatpush1.msra.mxu0 0.0
        %786 = vmatprep.subr.mxu0 0.0
        %787 = vmatpush1.msra.mxu0 0.0
        %788 = vmatprep.subr.mxu0 0.0
        %789 = vmatpush1.msra.mxu0 0.0
        %790 = vmatprep.mubr.f32.mxu0 0.0
        %791 = vmatmul.mubr.f32.gmra.mrb[0].mxu0 %v613
        %v792 = vpop.f32.mrb[0].mxu0
        %v793 = vadd.f32 %v594, %v792
        %v794 = vpop.f32.mrb[0].mxu0
        %v795 = vadd.f32 %v594, %v794
        %796 = vmatprep.mubr.f32.mxu0 0.0
        %797 = vmatmul.mubr.f32.gmra.mrb[0].mxu0 %v616
        %v798 = vpop.f32.mrb[0].mxu0
        %v799 = vadd.f32 %v599, %v798
        %v800 = vpop.f32.mrb[0].mxu0
        %v801 = vadd.f32 %v599, %v800
        %802 = vmatprep.mubr.f32.mxu0 0.0
        %803 = vmatmul.mubr.f32.gmra.mrb[0].mxu0 %v619
        %v804 = vpop.f32.mrb[0].mxu0
        %v805 = vadd.f32 %v604, %v804
        %v806 = vpop.f32.mrb[0].mxu0
        %v807 = vadd.f32 %v604, %v806
        %808 = vmatprep.mubr.f32.mxu0 0.0
        %809 = vmatmul.mubr.f32.gmra.mrb[0].mxu0 %v622
        %v810 = vpop.f32.mrb[0].mxu0
        %v811 = vadd.f32 %v609, %v810
        %v812 = vpop.f32.mrb[0].mxu0
        %v813 = vadd.f32 %v609, %v812
        %814 = vdwg.mxu0
        %v815 = vmax.f32 %v704, 0.0
        %v816 = vmax.f32 %v706, 0.0
        %v817 = vmax.f32 %v793, 0.0
        %v818 = vmax.f32 %v795, 0.0
        %v819 = vmax.f32 %v710, 0.0
        %v820 = vmax.f32 %v712, 0.0
        %v821 = vmax.f32 %v799, 0.0
        %v822 = vmax.f32 %v801, 0.0
        %v823 = vmax.f32 %v716, 0.0
        %v824 = vmax.f32 %v718, 0.0
        %v825 = vmax.f32 %v805, 0.0
        %v826 = vmax.f32 %v807, 0.0
        %v827 = vmax.f32 %v722, 0.0
        %v828 = vmax.f32 %v724, 0.0
        %v829 = vmax.f32 %v811, 0.0
        %v830 = vmax.f32 %v813, 0.0
        %v831 = vld [vmem:[%s4] sm:$0xff]
        %v832 = vld [vmem:[%s4 + $0x8] sm:$0xff]
        %v833 = vld [vmem:[%s5] sm:$0xff]
        %v834 = vld [vmem:[%s5 + $0x8] sm:$0xff]
        %836 = vset.pattern.permute.xlu0 0
        %837 = vperm.xlu0 %836, %v833
        %v838 = vpop.permute.xlu0 %837
        %841 = vset.pattern.permute.xlu0 0
        %842 = vperm.xlu0 %841, %v834
        %v843 = vpop.permute.xlu0 %842
        %vm845 = vcmask 261120
        %v847 = vsel %vm845, %v831, 0
        %v850 = vsel %vm845, %v832, 0
        %852 = vmatprep.subr.mxu0 %v816
        %853 = vmatpush1.msra.mxu0 %v815
        %854 = vmatprep.subr.mxu0 %v820
        %855 = vmatpush1.msra.mxu0 %v819
        %856 = vmatprep.subr.mxu0 %v824
        %857 = vmatpush1.msra.mxu0 %v823
        %858 = vmatprep.subr.mxu0 %v828
        %859 = vmatpush1.msra.mxu0 %v827
        %860 = vmatprep.subr.mxu0 0.0
        %861 = vmatpush1.msra.mxu0 0.0
        %862 = vmatprep.subr.mxu0 0.0
        %863 = vmatpush1.msra.mxu0 0.0
        %864 = vmatprep.subr.mxu0 0.0
        %865 = vmatpush1.msra.mxu0 0.0
        %866 = vmatprep.subr.mxu0 0.0
        %867 = vmatpush1.msra.mxu0 0.0
        %868 = vmatprep.subr.mxu0 0.0
        %869 = vmatpush1.msra.mxu0 0.0
        %870 = vmatprep.subr.mxu0 0.0
        %871 = vmatpush1.msra.mxu0 0.0
        %872 = vmatprep.subr.mxu0 0.0
        %873 = vmatpush1.msra.mxu0 0.0
        %874 = vmatprep.subr.mxu0 0.0
        %875 = vmatpush1.msra.mxu0 0.0
        %876 = vmatprep.subr.mxu0 0.0
        %877 = vmatpush1.msra.mxu0 0.0
        %878 = vmatprep.subr.mxu0 0.0
        %879 = vmatpush1.msra.mxu0 0.0
        %880 = vmatprep.subr.mxu0 0.0
        %881 = vmatpush1.msra.mxu0 0.0
        %882 = vmatprep.subr.mxu0 0.0
        %883 = vmatpush1.msra.mxu0 0.0
        %884 = vmatprep.subr.mxu0 0.0
        %885 = vmatpush1.msra.mxu0 0.0
        %886 = vmatprep.subr.mxu0 0.0
        %887 = vmatpush1.msra.mxu0 0.0
        %888 = vmatprep.subr.mxu0 0.0
        %889 = vmatpush1.msra.mxu0 0.0
        %890 = vmatprep.subr.mxu0 0.0
        %891 = vmatpush1.msra.mxu0 0.0
        %892 = vmatprep.subr.mxu0 0.0
        %893 = vmatpush1.msra.mxu0 0.0
        %894 = vmatprep.subr.mxu0 0.0
        %895 = vmatpush1.msra.mxu0 0.0
        %896 = vmatprep.subr.mxu0 0.0
        %897 = vmatpush1.msra.mxu0 0.0
        %898 = vmatprep.subr.mxu0 0.0
        %899 = vmatpush1.msra.mxu0 0.0
        %900 = vmatprep.subr.mxu0 0.0
        %901 = vmatpush1.msra.mxu0 0.0
        %902 = vmatprep.subr.mxu0 0.0
        %903 = vmatpush1.msra.mxu0 0.0
        %904 = vmatprep.subr.mxu0 0.0
        %905 = vmatpush1.msra.mxu0 0.0
        %906 = vmatprep.subr.mxu0 0.0
        %907 = vmatpush1.msra.mxu0 0.0
        %908 = vmatprep.subr.mxu0 0.0
        %909 = vmatpush1.msra.mxu0 0.0
        %910 = vmatprep.subr.mxu0 0.0
        %911 = vmatpush1.msra.mxu0 0.0
        %912 = vmatprep.subr.mxu0 0.0
        %913 = vmatpush1.msra.mxu0 0.0
        %914 = vmatprep.subr.mxu0 0.0
        %915 = vmatpush1.msra.mxu0 0.0
        %916 = vmatprep.mubr.f32.mxu0 0.0
        %917 = vmatmul.mubr.f32.gmra.mrb[0].mxu0 %v847
        %v918 = vpop.f32.mrb[0].mxu0
        %v919 = vadd.f32 %v838, %v918
        %v920 = vpop.f32.mrb[0].mxu0
        %v921 = vadd.f32 %v838, %v920
        %922 = vmatprep.mubr.f32.mxu0 0.0
        %923 = vmatmul.mubr.f32.gmra.mrb[0].mxu0 %v850
        %v924 = vpop.f32.mrb[0].mxu0
        %v925 = vadd.f32 %v843, %v924
        %v926 = vpop.f32.mrb[0].mxu0
        %v927 = vadd.f32 %v843, %v926
        %928 = vdwg.mxu0
        %929 = vmatprep.subr.mxu0 %v818
        %930 = vmatpush1.msra.mxu0 %v817
        %931 = vmatprep.subr.mxu0 %v822
        %932 = vmatpush1.msra.mxu0 %v821
        %933 = vmatprep.subr.mxu0 %v826
        %934 = vmatpush1.msra.mxu0 %v825
        %935 = vmatprep.subr.mxu0 %v830
        %936 = vmatpush1.msra.mxu0 %v829
        %937 = vmatprep.subr.mxu0 0.0
        %938 = vmatpush1.msra.mxu0 0.0
        %939 = vmatprep.subr.mxu0 0.0
        %940 = vmatpush1.msra.mxu0 0.0
        %941 = vmatprep.subr.mxu0 0.0
        %942 = vmatpush1.msra.mxu0 0.0
        %943 = vmatprep.subr.mxu0 0.0
        %944 = vmatpush1.msra.mxu0 0.0
        %945 = vmatprep.subr.mxu0 0.0
        %946 = vmatpush1.msra.mxu0 0.0
        %947 = vmatprep.subr.mxu0 0.0
        %948 = vmatpush1.msra.mxu0 0.0
        %949 = vmatprep.subr.mxu0 0.0
        %950 = vmatpush1.msra.mxu0 0.0
        %951 = vmatprep.subr.mxu0 0.0
        %952 = vmatpush1.msra.mxu0 0.0
        %953 = vmatprep.subr.mxu0 0.0
        %954 = vmatpush1.msra.mxu0 0.0
        %955 = vmatprep.subr.mxu0 0.0
        %956 = vmatpush1.msra.mxu0 0.0
        %957 = vmatprep.subr.mxu0 0.0
        %958 = vmatpush1.msra.mxu0 0.0
        %959 = vmatprep.subr.mxu0 0.0
        %960 = vmatpush1.msra.mxu0 0.0
        %961 = vmatprep.subr.mxu0 0.0
        %962 = vmatpush1.msra.mxu0 0.0
        %963 = vmatprep.subr.mxu0 0.0
        %964 = vmatpush1.msra.mxu0 0.0
        %965 = vmatprep.subr.mxu0 0.0
        %966 = vmatpush1.msra.mxu0 0.0
        %967 = vmatprep.subr.mxu0 0.0
        %968 = vmatpush1.msra.mxu0 0.0
        %969 = vmatprep.subr.mxu0 0.0
        %970 = vmatpush1.msra.mxu0 0.0
        %971 = vmatprep.subr.mxu0 0.0
        %972 = vmatpush1.msra.mxu0 0.0
        %973 = vmatprep.subr.mxu0 0.0
        %974 = vmatpush1.msra.mxu0 0.0
        %975 = vmatprep.subr.mxu0 0.0
        %976 = vmatpush1.msra.mxu0 0.0
        %977 = vmatprep.subr.mxu0 0.0
        %978 = vmatpush1.msra.mxu0 0.0
        %979 = vmatprep.subr.mxu0 0.0
        %980 = vmatpush1.msra.mxu0 0.0
        %981 = vmatprep.subr.mxu0 0.0
        %982 = vmatpush1.msra.mxu0 0.0
        %983 = vmatprep.subr.mxu0 0.0
        %984 = vmatpush1.msra.mxu0 0.0
        %985 = vmatprep.subr.mxu0 0.0
        %986 = vmatpush1.msra.mxu0 0.0
        %987 = vmatprep.subr.mxu0 0.0
        %988 = vmatpush1.msra.mxu0 0.0
        %989 = vmatprep.subr.mxu0 0.0
        %990 = vmatpush1.msra.mxu0 0.0
        %991 = vmatprep.subr.mxu0 0.0
        %992 = vmatpush1.msra.mxu0 0.0
        %993 = vmatprep.mubr.f32.mxu0 0.0
        %994 = vmatmul.mubr.f32.gmra.mrb[0].mxu0 %v847
        %v995 = vpop.f32.mrb[0].mxu0
        %v996 = vadd.f32 %v838, %v995
        %v997 = vpop.f32.mrb[0].mxu0
        %v998 = vadd.f32 %v838, %v997
        %999 = vmatprep.mubr.f32.mxu0 0.0
        %1000 = vmatmul.mubr.f32.gmra.mrb[0].mxu0 %v850
        %v1001 = vpop.f32.mrb[0].mxu0
        %v1002 = vadd.f32 %v843, %v1001
        %v1003 = vpop.f32.mrb[0].mxu0
        %v1004 = vadd.f32 %v843, %v1003
        %1005 = vdwg.mxu0
        %v1006 = vmax.f32 %v919, 0.0
        %v1007 = vmax.f32 %v921, 0.0
        %v1008 = vmax.f32 %v996, 0.0
        %v1009 = vmax.f32 %v998, 0.0
        %v1010 = vmax.f32 %v925, 0.0
        %v1011 = vmax.f32 %v927, 0.0
        %v1012 = vmax.f32 %v1002, 0.0
        %v1013 = vmax.f32 %v1004, 0.0
        %v1014 = vld [vmem:[%s6] sm:$0xff]
        %v1015 = vld [vmem:[%s6 + $0x8] sm:$0xff]
        %v1016 = vld [vmem:[%s7] sm:$0xff]
        %v1017 = vld [vmem:[%s7 + $0x8] sm:$0xff]
        %1019 = vset.pattern.permute.xlu0 0
        %1020 = vperm.xlu0 %1019, %v1016
        %v1021 = vpop.permute.xlu0 %1020
        %1024 = vset.pattern.permute.xlu0 0
        %1025 = vperm.xlu0 %1024, %v1017
        %v1026 = vpop.permute.xlu0 %1025
        %vm1028 = vcmask 130048
        %v1030 = vsel %vm1028, %v1014, 0
        %v1033 = vsel %vm1028, %v1015, 0
        %1035 = vmatprep.subr.mxu0 %v1007
        %1036 = vmatpush1.msra.mxu0 %v1006
        %1037 = vmatprep.subr.mxu0 %v1011
        %1038 = vmatpush1.msra.mxu0 %v1010
        %1039 = vmatprep.subr.mxu0 0.0
        %1040 = vmatpush1.msra.mxu0 0.0
        %1041 = vmatprep.subr.mxu0 0.0
        %1042 = vmatpush1.msra.mxu0 0.0
        %1043 = vmatprep.subr.mxu0 0.0
        %1044 = vmatpush1.msra.mxu0 0.0
        %1045 = vmatprep.subr.mxu0 0.0
        %1046 = vmatpush1.msra.mxu0 0.0
        %1047 = vmatprep.subr.mxu0 0.0
        %1048 = vmatpush1.msra.mxu0 0.0
        %1049 = vmatprep.subr.mxu0 0.0
        %1050 = vmatpush1.msra.mxu0 0.0
        %1051 = vmatprep.subr.mxu0 0.0
        %1052 = vmatpush1.msra.mxu0 0.0
        %1053 = vmatprep.subr.mxu0 0.0
        %1054 = vmatpush1.msra.mxu0 0.0
        %1055 = vmatprep.subr.mxu0 0.0
        %1056 = vmatpush1.msra.mxu0 0.0
        %1057 = vmatprep.subr.mxu0 0.0
        %1058 = vmatpush1.msra.mxu0 0.0
        %1059 = vmatprep.subr.mxu0 0.0
        %1060 = vmatpush1.msra.mxu0 0.0
        %1061 = vmatprep.subr.mxu0 0.0
        %1062 = vmatpush1.msra.mxu0 0.0
        %1063 = vmatprep.subr.mxu0 0.0
        %1064 = vmatpush1.msra.mxu0 0.0
        %1065 = vmatprep.subr.mxu0 0.0
        %1066 = vmatpush1.msra.mxu0 0.0
        %1067 = vmatprep.subr.mxu0 0.0
        %1068 = vmatpush1.msra.mxu0 0.0
        %1069 = vmatprep.subr.mxu0 0.0
        %1070 = vmatpush1.msra.mxu0 0.0
        %1071 = vmatprep.subr.mxu0 0.0
        %1072 = vmatpush1.msra.mxu0 0.0
        %1073 = vmatprep.subr.mxu0 0.0
        %1074 = vmatpush1.msra.mxu0 0.0
        %1075 = vmatprep.subr.mxu0 0.0
        %1076 = vmatpush1.msra.mxu0 0.0
        %1077 = vmatprep.subr.mxu0 0.0
        %1078 = vmatpush1.msra.mxu0 0.0
        %1079 = vmatprep.subr.mxu0 0.0
        %1080 = vmatpush1.msra.mxu0 0.0
        %1081 = vmatprep.subr.mxu0 0.0
        %1082 = vmatpush1.msra.mxu0 0.0
        %1083 = vmatprep.subr.mxu0 0.0
        %1084 = vmatpush1.msra.mxu0 0.0
        %1085 = vmatprep.subr.mxu0 0.0
        %1086 = vmatpush1.msra.mxu0 0.0
        %1087 = vmatprep.subr.mxu0 0.0
        %1088 = vmatpush1.msra.mxu0 0.0
        %1089 = vmatprep.subr.mxu0 0.0
        %1090 = vmatpush1.msra.mxu0 0.0
        %1091 = vmatprep.subr.mxu0 0.0
        %1092 = vmatpush1.msra.mxu0 0.0
        %1093 = vmatprep.subr.mxu0 0.0
        %1094 = vmatpush1.msra.mxu0 0.0
        %1095 = vmatprep.subr.mxu0 0.0
        %1096 = vmatpush1.msra.mxu0 0.0
        %1097 = vmatprep.subr.mxu0 0.0
        %1098 = vmatpush1.msra.mxu0 0.0
        %1099 = vmatprep.mubr.f32.mxu0 0.0
        %1100 = vmatmul.mubr.f32.gmra.mrb[0].mxu0 %v1030
        %v1101 = vpop.f32.mrb[0].mxu0
        %v1102 = vadd.f32 %v1021, %v1101
        %v1103 = vpop.f32.mrb[0].mxu0
        %v1104 = vadd.f32 %v1021, %v1103
        %1105 = vmatprep.mubr.f32.mxu0 0.0
        %1106 = vmatmul.mubr.f32.gmra.mrb[0].mxu0 %v1033
        %v1107 = vpop.f32.mrb[0].mxu0
        %v1108 = vadd.f32 %v1026, %v1107
        %v1109 = vpop.f32.mrb[0].mxu0
        %v1110 = vadd.f32 %v1026, %v1109
        %1111 = vdwg.mxu0
        %1112 = vmatprep.subr.mxu0 %v1009
        %1113 = vmatpush1.msra.mxu0 %v1008
        %1114 = vmatprep.subr.mxu0 %v1013
        %1115 = vmatpush1.msra.mxu0 %v1012
        %1116 = vmatprep.subr.mxu0 0.0
        %1117 = vmatpush1.msra.mxu0 0.0
        %1118 = vmatprep.subr.mxu0 0.0
        %1119 = vmatpush1.msra.mxu0 0.0
        %1120 = vmatprep.subr.mxu0 0.0
        %1121 = vmatpush1.msra.mxu0 0.0
        %1122 = vmatprep.subr.mxu0 0.0
        %1123 = vmatpush1.msra.mxu0 0.0
        %1124 = vmatprep.subr.mxu0 0.0
        %1125 = vmatpush1.msra.mxu0 0.0
        %1126 = vmatprep.subr.mxu0 0.0
        %1127 = vmatpush1.msra.mxu0 0.0
        %1128 = vmatprep.subr.mxu0 0.0
        %1129 = vmatpush1.msra.mxu0 0.0
        %1130 = vmatprep.subr.mxu0 0.0
        %1131 = vmatpush1.msra.mxu0 0.0
        %1132 = vmatprep.subr.mxu0 0.0
        %1133 = vmatpush1.msra.mxu0 0.0
        %1134 = vmatprep.subr.mxu0 0.0
        %1135 = vmatpush1.msra.mxu0 0.0
        %1136 = vmatprep.subr.mxu0 0.0
        %1137 = vmatpush1.msra.mxu0 0.0
        %1138 = vmatprep.subr.mxu0 0.0
        %1139 = vmatpush1.msra.mxu0 0.0
        %1140 = vmatprep.subr.mxu0 0.0
        %1141 = vmatpush1.msra.mxu0 0.0
        %1142 = vmatprep.subr.mxu0 0.0
        %1143 = vmatpush1.msra.mxu0 0.0
        %1144 = vmatprep.subr.mxu0 0.0
        %1145 = vmatpush1.msra.mxu0 0.0
        %1146 = vmatprep.subr.mxu0 0.0
        %1147 = vmatpush1.msra.mxu0 0.0
        %1148 = vmatprep.subr.mxu0 0.0
        %1149 = vmatpush1.msra.mxu0 0.0
        %1150 = vmatprep.subr.mxu0 0.0
        %1151 = vmatpush1.msra.mxu0 0.0
        %1152 = vmatprep.subr.mxu0 0.0
        %1153 = vmatpush1.msra.mxu0 0.0
        %1154 = vmatprep.subr.mxu0 0.0
        %1155 = vmatpush1.msra.mxu0 0.0
        %1156 = vmatprep.subr.mxu0 0.0
        %1157 = vmatpush1.msra.mxu0 0.0
        %1158 = vmatprep.subr.mxu0 0.0
        %1159 = vmatpush1.msra.mxu0 0.0
        %1160 = vmatprep.subr.mxu0 0.0
        %1161 = vmatpush1.msra.mxu0 0.0
        %1162 = vmatprep.subr.mxu0 0.0
        %1163 = vmatpush1.msra.mxu0 0.0
        %1164 = vmatprep.subr.mxu0 0.0
        %1165 = vmatpush1.msra.mxu0 0.0
        %1166 = vmatprep.subr.mxu0 0.0
        %1167 = vmatpush1.msra.mxu0 0.0
        %1168 = vmatprep.subr.mxu0 0.0
        %1169 = vmatpush1.msra.mxu0 0.0
        %1170 = vmatprep.subr.mxu0 0.0
        %1171 = vmatpush1.msra.mxu0 0.0
        %1172 = vmatprep.subr.mxu0 0.0
        %1173 = vmatpush1.msra.mxu0 0.0
        %1174 = vmatprep.subr.mxu0 0.0
        %1175 = vmatpush1.msra.mxu0 0.0
        %1176 = vmatprep.mubr.f32.mxu0 0.0
        %1177 = vmatmul.mubr.f32.gmra.mrb[0].mxu0 %v1030
        %v1178 = vpop.f32.mrb[0].mxu0
        %v1179 = vadd.f32 %v1021, %v1178
        %v1180 = vpop.f32.mrb[0].mxu0
        %v1181 = vadd.f32 %v1021, %v1180
        %1182 = vmatprep.mubr.f32.mxu0 0.0
        %1183 = vmatmul.mubr.f32.gmra.mrb[0].mxu0 %v1033
        %v1184 = vpop.f32.mrb[0].mxu0
        %v1185 = vadd.f32 %v1026, %v1184
        %v1186 = vpop.f32.mrb[0].mxu0
        %v1187 = vadd.f32 %v1026, %v1186
        %1188 = vdwg.mxu0
        %v1189 = vmul.f32 %v1102, 0.5
        %v1190 = vmul.f32 %v1104, 0.5
        %v1191 = vmul.f32 %v1179, 0.5
        %v1192 = vmul.f32 %v1181, 0.5
        %v1193 = vmul.f32 %v1108, 0.5
        %v1194 = vmul.f32 %v1110, 0.5
        %v1195 = vmul.f32 %v1185, 0.5
        %v1196 = vmul.f32 %v1187, 0.5
        %v1197 = vmul.f32 %v1189, 1.442695
        %v1198 = vpow.pop %v1197
        %v1199 = vmul.f32 %v1190, 1.442695
        %v1200 = vpow.pop %v1199
        %v1201 = vmul.f32 %v1191, 1.442695
        %v1202 = vpow.pop %v1201
        %v1203 = vmul.f32 %v1192, 1.442695
        %v1204 = vpow.pop %v1203
        %v1205 = vmul.f32 %v1193, 1.442695
        %v1206 = vpow.pop %v1205
        %v1207 = vmul.f32 %v1194, 1.442695
        %v1208 = vpow.pop %v1207
        %v1209 = vmul.f32 %v1195, 1.442695
        %v1210 = vpow.pop %v1209
        %v1211 = vmul.f32 %v1196, 1.442695
        %v1212 = vpow.pop %v1211
        %v1213 = vld [vmem:[%s476] sm:$0xff]
        %v1214 = vld [vmem:[%s476 + $0x8] sm:$0xff]
        %v1215 = vld [vmem:[%s476 + $0x10] sm:$0xff]
        %v1216 = vld [vmem:[%s476 + $0x18] sm:$0xff]
        %v1217 = vld [vmem:[%s476 + $0x20] sm:$0xff]
        %v1218 = vld [vmem:[%s476 + $0x28] sm:$0xff]
        %v1219 = vld [vmem:[%s476 + $0x30] sm:$0xff]
        %v1220 = vld [vmem:[%s476 + $0x38] sm:$0xff]
        %v1221 = vmul.f32 %v1198, %v1213
        %v1222 = vmul.f32 %v1200, %v1214
        %v1223 = vmul.f32 %v1202, %v1215
        %v1224 = vmul.f32 %v1204, %v1216
        %v1225 = vmul.f32 %v1206, %v1217
        %v1226 = vmul.f32 %v1208, %v1218
        %v1227 = vmul.f32 %v1210, %v1219
        %v1228 = vmul.f32 %v1212, %v1220
        %v1229 = vadd.f32 %v1102, %v1221
        %v1230 = vadd.f32 %v1104, %v1222
        %v1231 = vadd.f32 %v1179, %v1223
        %v1232 = vadd.f32 %v1181, %v1224
        %v1233 = vadd.f32 %v1108, %v1225
        %v1234 = vadd.f32 %v1110, %v1226
        %v1235 = vadd.f32 %v1185, %v1227
        %v1236 = vadd.f32 %v1187, %v1228
        %v1237 = vld [vmem:[%s8] sm:$0xff]
        %v1238 = vld [vmem:[%s8 + $0x8] sm:$0xff]
        %v1239 = vld [vmem:[%s8 + $0x10] sm:$0xff]
        %v1240 = vld [vmem:[%s8 + $0x18] sm:$0xff]
        %v1241 = vld [vmem:[%s9] sm:$0xff]
        %v1242 = vld [vmem:[%s9 + $0x8] sm:$0xff]
        %v1243 = vld [vmem:[%s9 + $0x10] sm:$0xff]
        %v1244 = vld [vmem:[%s9 + $0x18] sm:$0xff]
        %1246 = vset.pattern.permute.xlu0 0
        %1247 = vperm.xlu0 %1246, %v1241
        %v1248 = vpop.permute.xlu0 %1247
        %1251 = vset.pattern.permute.xlu0 0
        %1252 = vperm.xlu0 %1251, %v1242
        %v1253 = vpop.permute.xlu0 %1252
        %1256 = vset.pattern.permute.xlu0 0
        %1257 = vperm.xlu0 %1256, %v1243
        %v1258 = vpop.permute.xlu0 %1257
        %1261 = vset.pattern.permute.xlu0 0
        %1262 = vperm.xlu0 %1261, %v1244
        %v1263 = vpop.permute.xlu0 %1262
        %v1266 = vsel %vm1028, %v1237, 0
        %v1269 = vsel %vm1028, %v1238, 0
        %v1272 = vsel %vm1028, %v1239, 0
        %v1275 = vsel %vm1028, %v1240, 0
        %1277 = vmatprep.subr.mxu0 %v1230
        %1278 = vmatpush1.msra.mxu0 %v1229
        %1279 = vmatprep.subr.mxu0 %v1234
        %1280 = vmatpush1.msra.mxu0 %v1233
        %1281 = vmatprep.subr.mxu0 0.0
        %1282 = vmatpush1.msra.mxu0 0.0
        %1283 = vmatprep.subr.mxu0 0.0
        %1284 = vmatpush1.msra.mxu0 0.0
        %1285 = vmatprep.subr.mxu0 0.0
        %1286 = vmatpush1.msra.mxu0 0.0
        %1287 = vmatprep.subr.mxu0 0.0
        %1288 = vmatpush1.msra.mxu0 0.0
        %1289 = vmatprep.subr.mxu0 0.0
        %1290 = vmatpush1.msra.mxu0 0.0
        %1291 = vmatprep.subr.mxu0 0.0
        %1292 = vmatpush1.msra.mxu0 0.0
        %1293 = vmatprep.subr.mxu0 0.0
        %1294 = vmatpush1.msra.mxu0 0.0
        %1295 = vmatprep.subr.mxu0 0.0
        %1296 = vmatpush1.msra.mxu0 0.0
        %1297 = vmatprep.subr.mxu0 0.0
        %1298 = vmatpush1.msra.mxu0 0.0
        %1299 = vmatprep.subr.mxu0 0.0
        %1300 = vmatpush1.msra.mxu0 0.0
        %1301 = vmatprep.subr.mxu0 0.0
        %1302 = vmatpush1.msra.mxu0 0.0
        %1303 = vmatprep.subr.mxu0 0.0
        %1304 = vmatpush1.msra.mxu0 0.0
        %1305 = vmatprep.subr.mxu0 0.0
        %1306 = vmatpush1.msra.mxu0 0.0
        %1307 = vmatprep.subr.mxu0 0.0
        %1308 = vmatpush1.msra.mxu0 0.0
        %1309 = vmatprep.subr.mxu0 0.0
        %1310 = vmatpush1.msra.mxu0 0.0
        %1311 = vmatprep.subr.mxu0 0.0
        %1312 = vmatpush1.msra.mxu0 0.0
        %1313 = vmatprep.subr.mxu0 0.0
        %1314 = vmatpush1.msra.mxu0 0.0
        %1315 = vmatprep.subr.mxu0 0.0
        %1316 = vmatpush1.msra.mxu0 0.0
        %1317 = vmatprep.subr.mxu0 0.0
        %1318 = vmatpush1.msra.mxu0 0.0
        %1319 = vmatprep.subr.mxu0 0.0
        %1320 = vmatpush1.msra.mxu0 0.0
        %1321 = vmatprep.subr.mxu0 0.0
        %1322 = vmatpush1.msra.mxu0 0.0
        %1323 = vmatprep.subr.mxu0 0.0
        %1324 = vmatpush1.msra.mxu0 0.0
        %1325 = vmatprep.subr.mxu0 0.0
        %1326 = vmatpush1.msra.mxu0 0.0
        %1327 = vmatprep.subr.mxu0 0.0
        %1328 = vmatpush1.msra.mxu0 0.0
        %1329 = vmatprep.subr.mxu0 0.0
        %1330 = vmatpush1.msra.mxu0 0.0
        %1331 = vmatprep.subr.mxu0 0.0
        %1332 = vmatpush1.msra.mxu0 0.0
        %1333 = vmatprep.subr.mxu0 0.0
        %1334 = vmatpush1.msra.mxu0 0.0
        %1335 = vmatprep.subr.mxu0 0.0
        %1336 = vmatpush1.msra.mxu0 0.0
        %1337 = vmatprep.subr.mxu0 0.0
        %1338 = vmatpush1.msra.mxu0 0.0
        %1339 = vmatprep.subr.mxu0 0.0
        %1340 = vmatpush1.msra.mxu0 0.0
        %1341 = vmatprep.mubr.f32.mxu0 0.0
        %1342 = vmatmul.mubr.f32.gmra.mrb[0].mxu0 %v1266
        %v1343 = vpop.f32.mrb[0].mxu0
        %v1344 = vadd.f32 %v1248, %v1343
        %v1345 = vpop.f32.mrb[0].mxu0
        %v1346 = vadd.f32 %v1248, %v1345
        %1347 = vmatprep.mubr.f32.mxu0 0.0
        %1348 = vmatmul.mubr.f32.gmra.mrb[0].mxu0 %v1269
        %v1349 = vpop.f32.mrb[0].mxu0
        %v1350 = vadd.f32 %v1253, %v1349
        %v1351 = vpop.f32.mrb[0].mxu0
        %v1352 = vadd.f32 %v1253, %v1351
        %1353 = vmatprep.mubr.f32.mxu0 0.0
        %1354 = vmatmul.mubr.f32.gmra.mrb[0].mxu0 %v1272
        %v1355 = vpop.f32.mrb[0].mxu0
        %v1356 = vadd.f32 %v1258, %v1355
        %v1357 = vpop.f32.mrb[0].mxu0
        %v1358 = vadd.f32 %v1258, %v1357
        %1359 = vmatprep.mubr.f32.mxu0 0.0
        %1360 = vmatmul.mubr.f32.gmra.mrb[0].mxu0 %v1275
        %v1361 = vpop.f32.mrb[0].mxu0
        %v1362 = vadd.f32 %v1263, %v1361
        %v1363 = vpop.f32.mrb[0].mxu0
        %v1364 = vadd.f32 %v1263, %v1363
        %1365 = vdwg.mxu0
        %1366 = vmatprep.subr.mxu0 %v1232
        %1367 = vmatpush1.msra.mxu0 %v1231
        %1368 = vmatprep.subr.mxu0 %v1236
        %1369 = vmatpush1.msra.mxu0 %v1235
        %1370 = vmatprep.subr.mxu0 0.0
        %1371 = vmatpush1.msra.mxu0 0.0
        %1372 = vmatprep.subr.mxu0 0.0
        %1373 = vmatpush1.msra.mxu0 0.0
        %1374 = vmatprep.subr.mxu0 0.0
        %1375 = vmatpush1.msra.mxu0 0.0
        %1376 = vmatprep.subr.mxu0 0.0
        %1377 = vmatpush1.msra.mxu0 0.0
        %1378 = vmatprep.subr.mxu0 0.0
        %1379 = vmatpush1.msra.mxu0 0.0
        %1380 = vmatprep.subr.mxu0 0.0
        %1381 = vmatpush1.msra.mxu0 0.0
        %1382 = vmatprep.subr.mxu0 0.0
        %1383 = vmatpush1.msra.mxu0 0.0
        %1384 = vmatprep.subr.mxu0 0.0
        %1385 = vmatpush1.msra.mxu0 0.0
        %1386 = vmatprep.subr.mxu0 0.0
        %1387 = vmatpush1.msra.mxu0 0.0
        %1388 = vmatprep.subr.mxu0 0.0
        %1389 = vmatpush1.msra.mxu0 0.0
        %1390 = vmatprep.subr.mxu0 0.0
        %1391 = vmatpush1.msra.mxu0 0.0
        %1392 = vmatprep.subr.mxu0 0.0
        %1393 = vmatpush1.msra.mxu0 0.0
        %1394 = vmatprep.subr.mxu0 0.0
        %1395 = vmatpush1.msra.mxu0 0.0
        %1396 = vmatprep.subr.mxu0 0.0
        %1397 = vmatpush1.msra.mxu0 0.0
        %1398 = vmatprep.subr.mxu0 0.0
        %1399 = vmatpush1.msra.mxu0 0.0
        %1400 = vmatprep.subr.mxu0 0.0
        %1401 = vmatpush1.msra.mxu0 0.0
        %1402 = vmatprep.subr.mxu0 0.0
        %1403 = vmatpush1.msra.mxu0 0.0
        %1404 = vmatprep.subr.mxu0 0.0
        %1405 = vmatpush1.msra.mxu0 0.0
        %1406 = vmatprep.subr.mxu0 0.0
        %1407 = vmatpush1.msra.mxu0 0.0
        %1408 = vmatprep.subr.mxu0 0.0
        %1409 = vmatpush1.msra.mxu0 0.0
        %1410 = vmatprep.subr.mxu0 0.0
        %1411 = vmatpush1.msra.mxu0 0.0
        %1412 = vmatprep.subr.mxu0 0.0
        %1413 = vmatpush1.msra.mxu0 0.0
        %1414 = vmatprep.subr.mxu0 0.0
        %1415 = vmatpush1.msra.mxu0 0.0
        %1416 = vmatprep.subr.mxu0 0.0
        %1417 = vmatpush1.msra.mxu0 0.0
        %1418 = vmatprep.subr.mxu0 0.0
        %1419 = vmatpush1.msra.mxu0 0.0
        %1420 = vmatprep.subr.mxu0 0.0
        %1421 = vmatpush1.msra.mxu0 0.0
        %1422 = vmatprep.subr.mxu0 0.0
        %1423 = vmatpush1.msra.mxu0 0.0
        %1424 = vmatprep.subr.mxu0 0.0
        %1425 = vmatpush1.msra.mxu0 0.0
        %1426 = vmatprep.subr.mxu0 0.0
        %1427 = vmatpush1.msra.mxu0 0.0
        %1428 = vmatprep.subr.mxu0 0.0
        %1429 = vmatpush1.msra.mxu0 0.0
        %1430 = vmatprep.mubr.f32.mxu0 0.0
        %1431 = vmatmul.mubr.f32.gmra.mrb[0].mxu0 %v1266
        %v1432 = vpop.f32.mrb[0].mxu0
        %v1433 = vadd.f32 %v1248, %v1432
        %v1434 = vpop.f32.mrb[0].mxu0
        %v1435 = vadd.f32 %v1248, %v1434
        %1436 = vmatprep.mubr.f32.mxu0 0.0
        %1437 = vmatmul.mubr.f32.gmra.mrb[0].mxu0 %v1269
        %v1438 = vpop.f32.mrb[0].mxu0
        %v1439 = vadd.f32 %v1253, %v1438
        %v1440 = vpop.f32.mrb[0].mxu0
        %v1441 = vadd.f32 %v1253, %v1440
        %1442 = vmatprep.mubr.f32.mxu0 0.0
        %1443 = vmatmul.mubr.f32.gmra.mrb[0].mxu0 %v1272
        %v1444 = vpop.f32.mrb[0].mxu0
        %v1445 = vadd.f32 %v1258, %v1444
        %v1446 = vpop.f32.mrb[0].mxu0
        %v1447 = vadd.f32 %v1258, %v1446
        %1448 = vmatprep.mubr.f32.mxu0 0.0
        %1449 = vmatmul.mubr.f32.gmra.mrb[0].mxu0 %v1275
        %v1450 = vpop.f32.mrb[0].mxu0
        %v1451 = vadd.f32 %v1263, %v1450
        %v1452 = vpop.f32.mrb[0].mxu0
        %v1453 = vadd.f32 %v1263, %v1452
        %1454 = vdwg.mxu0
        %v1455 = vmax.f32 %v1344, 0.0
        %v1456 = vmax.f32 %v1346, 0.0
        %v1457 = vmax.f32 %v1433, 0.0
        %v1458 = vmax.f32 %v1435, 0.0
        %v1459 = vmax.f32 %v1350, 0.0
        %v1460 = vmax.f32 %v1352, 0.0
        %v1461 = vmax.f32 %v1439, 0.0
        %v1462 = vmax.f32 %v1441, 0.0
        %v1463 = vmax.f32 %v1356, 0.0
        %v1464 = vmax.f32 %v1358, 0.0
        %v1465 = vmax.f32 %v1445, 0.0
        %v1466 = vmax.f32 %v1447, 0.0
        %v1467 = vmax.f32 %v1362, 0.0
        %v1468 = vmax.f32 %v1364, 0.0
        %v1469 = vmax.f32 %v1451, 0.0
        %v1470 = vmax.f32 %v1453, 0.0
        %v1471 = vld [vmem:[%s10] sm:$0x7]
        %v1472 = vld [vmem:[%s11] sm:$0x7]
        %1474 = vset.pattern.permute.xlu0 0
        %1475 = vperm.xlu0 %1474, %v1472
        %v1476 = vpop.permute.xlu0 %1475
        %v1479 = vsel %vm845, %v1471, 0
        %1481 = vmatprep.subr.mxu0 %v1456
        %1482 = vmatpush1.msra.mxu0 %v1455
        %1483 = vmatprep.subr.mxu0 %v1460
        %1484 = vmatpush1.msra.mxu0 %v1459
        %1485 = vmatprep.subr.mxu0 %v1464
        %1486 = vmatpush1.msra.mxu0 %v1463
        %1487 = vmatprep.subr.mxu0 %v1468
        %1488 = vmatpush1.msra.mxu0 %v1467
        %1489 = vmatprep.subr.mxu0 0.0
        %1490 = vmatpush1.msra.mxu0 0.0
        %1491 = vmatprep.subr.mxu0 0.0
        %1492 = vmatpush1.msra.mxu0 0.0
        %1493 = vmatprep.subr.mxu0 0.0
        %1494 = vmatpush1.msra.mxu0 0.0
        %1495 = vmatprep.subr.mxu0 0.0
        %1496 = vmatpush1.msra.mxu0 0.0
        %1497 = vmatprep.subr.mxu0 0.0
        %1498 = vmatpush1.msra.mxu0 0.0
        %1499 = vmatprep.subr.mxu0 0.0
        %1500 = vmatpush1.msra.mxu0 0.0
        %1501 = vmatprep.subr.mxu0 0.0
        %1502 = vmatpush1.msra.mxu0 0.0
        %1503 = vmatprep.subr.mxu0 0.0
        %1504 = vmatpush1.msra.mxu0 0.0
        %1505 = vmatprep.subr.mxu0 0.0
        %1506 = vmatpush1.msra.mxu0 0.0
        %1507 = vmatprep.subr.mxu0 0.0
        %1508 = vmatpush1.msra.mxu0 0.0
        %1509 = vmatprep.subr.mxu0 0.0
        %1510 = vmatpush1.msra.mxu0 0.0
        %1511 = vmatprep.subr.mxu0 0.0
        %1512 = vmatpush1.msra.mxu0 0.0
        %1513 = vmatprep.subr.mxu0 0.0
        %1514 = vmatpush1.msra.mxu0 0.0
        %1515 = vmatprep.subr.mxu0 0.0
        %1516 = vmatpush1.msra.mxu0 0.0
        %1517 = vmatprep.subr.mxu0 0.0
        %1518 = vmatpush1.msra.mxu0 0.0
        %1519 = vmatprep.subr.mxu0 0.0
        %1520 = vmatpush1.msra.mxu0 0.0
        %1521 = vmatprep.subr.mxu0 0.0
        %1522 = vmatpush1.msra.mxu0 0.0
        %1523 = vmatprep.subr.mxu0 0.0
        %1524 = vmatpush1.msra.mxu0 0.0
        %1525 = vmatprep.subr.mxu0 0.0
        %1526 = vmatpush1.msra.mxu0 0.0
        %1527 = vmatprep.subr.mxu0 0.0
        %1528 = vmatpush1.msra.mxu0 0.0
        %1529 = vmatprep.subr.mxu0 0.0
        %1530 = vmatpush1.msra.mxu0 0.0
        %1531 = vmatprep.subr.mxu0 0.0
        %1532 = vmatpush1.msra.mxu0 0.0
        %1533 = vmatprep.subr.mxu0 0.0
        %1534 = vmatpush1.msra.mxu0 0.0
        %1535 = vmatprep.subr.mxu0 0.0
        %1536 = vmatpush1.msra.mxu0 0.0
        %1537 = vmatprep.subr.mxu0 0.0
        %1538 = vmatpush1.msra.mxu0 0.0
        %1539 = vmatprep.subr.mxu0 0.0
        %1540 = vmatpush1.msra.mxu0 0.0
        %1541 = vmatprep.subr.mxu0 0.0
        %1542 = vmatpush1.msra.mxu0 0.0
        %1543 = vmatprep.subr.mxu0 0.0
        %1544 = vmatpush1.msra.mxu0 0.0
        %1545 = vmatprep.mubr.f32.mxu0 0.0
        %1546 = vmatmul.mubr.f32.gmra.mrb[0].mxu0 %v1479
        %v1547 = vpop.f32.mrb[0].mxu0
        %v1548 = vadd.f32 %v1476, %v1547
        %v1549 = vpop.f32.mrb[0].mxu0
        %v1550 = vadd.f32 %v1476, %v1549
        %1551 = vdwg.mxu0
        %1552 = vmatprep.subr.mxu0 %v1458
        %1553 = vmatpush1.msra.mxu0 %v1457
        %1554 = vmatprep.subr.mxu0 %v1462
        %1555 = vmatpush1.msra.mxu0 %v1461
        %1556 = vmatprep.subr.mxu0 %v1466
        %1557 = vmatpush1.msra.mxu0 %v1465
        %1558 = vmatprep.subr.mxu0 %v1470
        %1559 = vmatpush1.msra.mxu0 %v1469
        %1560 = vmatprep.subr.mxu0 0.0
        %1561 = vmatpush1.msra.mxu0 0.0
        %1562 = vmatprep.subr.mxu0 0.0
        %1563 = vmatpush1.msra.mxu0 0.0
        %1564 = vmatprep.subr.mxu0 0.0
        %1565 = vmatpush1.msra.mxu0 0.0
        %1566 = vmatprep.subr.mxu0 0.0
        %1567 = vmatpush1.msra.mxu0 0.0
        %1568 = vmatprep.subr.mxu0 0.0
        %1569 = vmatpush1.msra.mxu0 0.0
        %1570 = vmatprep.subr.mxu0 0.0
        %1571 = vmatpush1.msra.mxu0 0.0
        %1572 = vmatprep.subr.mxu0 0.0
        %1573 = vmatpush1.msra.mxu0 0.0
        %1574 = vmatprep.subr.mxu0 0.0
        %1575 = vmatpush1.msra.mxu0 0.0
        %1576 = vmatprep.subr.mxu0 0.0
        %1577 = vmatpush1.msra.mxu0 0.0
        %1578 = vmatprep.subr.mxu0 0.0
        %1579 = vmatpush1.msra.mxu0 0.0
        %1580 = vmatprep.subr.mxu0 0.0
        %1581 = vmatpush1.msra.mxu0 0.0
        %1582 = vmatprep.subr.mxu0 0.0
        %1583 = vmatpush1.msra.mxu0 0.0
        %1584 = vmatprep.subr.mxu0 0.0
        %1585 = vmatpush1.msra.mxu0 0.0
        %1586 = vmatprep.subr.mxu0 0.0
        %1587 = vmatpush1.msra.mxu0 0.0
        %1588 = vmatprep.subr.mxu0 0.0
        %1589 = vmatpush1.msra.mxu0 0.0
        %1590 = vmatprep.subr.mxu0 0.0
        %1591 = vmatpush1.msra.mxu0 0.0
        %1592 = vmatprep.subr.mxu0 0.0
        %1593 = vmatpush1.msra.mxu0 0.0
        %1594 = vmatprep.subr.mxu0 0.0
        %1595 = vmatpush1.msra.mxu0 0.0
        %1596 = vmatprep.subr.mxu0 0.0
        %1597 = vmatpush1.msra.mxu0 0.0
        %1598 = vmatprep.subr.mxu0 0.0
        %1599 = vmatpush1.msra.mxu0 0.0
        %1600 = vmatprep.subr.mxu0 0.0
        %1601 = vmatpush1.msra.mxu0 0.0
        %1602 = vmatprep.subr.mxu0 0.0
        %1603 = vmatpush1.msra.mxu0 0.0
        %1604 = vmatprep.subr.mxu0 0.0
        %1605 = vmatpush1.msra.mxu0 0.0
        %1606 = vmatprep.subr.mxu0 0.0
        %1607 = vmatpush1.msra.mxu0 0.0
        %1608 = vmatprep.subr.mxu0 0.0
        %1609 = vmatpush1.msra.mxu0 0.0
        %1610 = vmatprep.subr.mxu0 0.0
        %1611 = vmatpush1.msra.mxu0 0.0
        %1612 = vmatprep.subr.mxu0 0.0
        %1613 = vmatpush1.msra.mxu0 0.0
        %1614 = vmatprep.subr.mxu0 0.0
        %1615 = vmatpush1.msra.mxu0 0.0
        %1616 = vmatprep.mubr.f32.mxu0 0.0
        %1617 = vmatmul.mubr.f32.gmra.mrb[0].mxu0 %v1479
        %v1618 = vpop.f32.mrb[0].mxu0
        %v1619 = vadd.f32 %v1476, %v1618
        %v1620 = vpop.f32.mrb[0].mxu0
        %v1621 = vadd.f32 %v1476, %v1620
        %1622 = vdwg.mxu0
        %v1623 = vmax.f32 %v1548, 0.0
        %v1624 = vmax.f32 %v1550, 0.0
        %v1625 = vmax.f32 %v1619, 0.0
        %v1626 = vmax.f32 %v1621, 0.0
        %v1627 = vld [vmem:[%s12] sm:$0xff]
        %v1628 = vld [vmem:[%s12 + $0x8] sm:$0x7]
        %v1629 = vld [vmem:[%s13] sm:$0xff]
        %v1630 = vld [vmem:[%s13 + $0x8] sm:$0x7]
        %1632 = vset.pattern.permute.xlu0 0
        %1633 = vperm.xlu0 %1632, %v1629
        %v1634 = vpop.permute.xlu0 %1633
        %1637 = vset.pattern.permute.xlu0 0
        %1638 = vperm.xlu0 %1637, %v1630
        %v1639 = vpop.permute.xlu0 %1638
        %vm1641 = vcmask 23552
        %v1643 = vsel %vm1641, %v1627, 0
        %v1646 = vsel %vm1641, %v1628, 0
        %v1649 = vsel %vm624, %v1623, 0
        %v1652 = vsel %vm624, %v1624, 0
        %v1655 = vsel %vm624, %v1625, 0
        %v1658 = vsel %vm624, %v1626, 0
        %1660 = vmatprep.subr.mxu0 %v1652
        %1661 = vmatpush1.msra.mxu0 %v1649
        %1662 = vmatprep.subr.mxu0 0.0
        %1663 = vmatpush1.msra.mxu0 0.0
        %1664 = vmatprep.subr.mxu0 0.0
        %1665 = vmatpush1.msra.mxu0 0.0
        %1666 = vmatprep.subr.mxu0 0.0
        %1667 = vmatpush1.msra.mxu0 0.0
        %1668 = vmatprep.subr.mxu0 0.0
        %1669 = vmatpush1.msra.mxu0 0.0
        %1670 = vmatprep.subr.mxu0 0.0
        %1671 = vmatpush1.msra.mxu0 0.0
        %1672 = vmatprep.subr.mxu0 0.0
        %1673 = vmatpush1.msra.mxu0 0.0
        %1674 = vmatprep.subr.mxu0 0.0
        %1675 = vmatpush1.msra.mxu0 0.0
        %1676 = vmatprep.subr.mxu0 0.0
        %1677 = vmatpush1.msra.mxu0 0.0
        %1678 = vmatprep.subr.mxu0 0.0
        %1679 = vmatpush1.msra.mxu0 0.0
        %1680 = vmatprep.subr.mxu0 0.0
        %1681 = vmatpush1.msra.mxu0 0.0
        %1682 = vmatprep.subr.mxu0 0.0
        %1683 = vmatpush1.msra.mxu0 0.0
        %1684 = vmatprep.subr.mxu0 0.0
        %1685 = vmatpush1.msra.mxu0 0.0
        %1686 = vmatprep.subr.mxu0 0.0
        %1687 = vmatpush1.msra.mxu0 0.0
        %1688 = vmatprep.subr.mxu0 0.0
        %1689 = vmatpush1.msra.mxu0 0.0
        %1690 = vmatprep.subr.mxu0 0.0
        %1691 = vmatpush1.msra.mxu0 0.0
        %1692 = vmatprep.subr.mxu0 0.0
        %1693 = vmatpush1.msra.mxu0 0.0
        %1694 = vmatprep.subr.mxu0 0.0
        %1695 = vmatpush1.msra.mxu0 0.0
        %1696 = vmatprep.subr.mxu0 0.0
        %1697 = vmatpush1.msra.mxu0 0.0
        %1698 = vmatprep.subr.mxu0 0.0
        %1699 = vmatpush1.msra.mxu0 0.0
        %1700 = vmatprep.subr.mxu0 0.0
        %1701 = vmatpush1.msra.mxu0 0.0
        %1702 = vmatprep.subr.mxu0 0.0
        %1703 = vmatpush1.msra.mxu0 0.0
        %1704 = vmatprep.subr.mxu0 0.0
        %1705 = vmatpush1.msra.mxu0 0.0
        %1706 = vmatprep.subr.mxu0 0.0
        %1707 = vmatpush1.msra.mxu0 0.0
        %1708 = vmatprep.subr.mxu0 0.0
        %1709 = vmatpush1.msra.mxu0 0.0
        %1710 = vmatprep.subr.mxu0 0.0
        %1711 = vmatpush1.msra.mxu0 0.0
        %1712 = vmatprep.subr.mxu0 0.0
        %1713 = vmatpush1.msra.mxu0 0.0
        %1714 = vmatprep.subr.mxu0 0.0
        %1715 = vmatpush1.msra.mxu0 0.0
        %1716 = vmatprep.subr.mxu0 0.0
        %1717 = vmatpush1.msra.mxu0 0.0
        %1718 = vmatprep.subr.mxu0 0.0
        %1719 = vmatpush1.msra.mxu0 0.0
        %1720 = vmatprep.subr.mxu0 0.0
        %1721 = vmatpush1.msra.mxu0 0.0
        %1722 = vmatprep.subr.mxu0 0.0
        %1723 = vmatpush1.msra.mxu0 0.0
        %1724 = vmatprep.mubr.f32.mxu0 0.0
        %1725 = vmatmul.mubr.f32.gmra.mrb[0].mxu0 %v1643
        %v1726 = vpop.f32.mrb[0].mxu0
        %v1727 = vadd.f32 %v1634, %v1726
        %v1728 = vpop.f32.mrb[0].mxu0
        %v1729 = vadd.f32 %v1634, %v1728
        %1730 = vmatprep.mubr.f32.mxu0 0.0
        %1731 = vmatmul.mubr.f32.gmra.mrb[0].mxu0 %v1646
        %v1732 = vpop.f32.mrb[0].mxu0
        %v1733 = vadd.f32 %v1639, %v1732
        %v1734 = vpop.f32.mrb[0].mxu0
        %v1735 = vadd.f32 %v1639, %v1734
        %1736 = vdwg.mxu0
        %1737 = vmatprep.subr.mxu0 %v1658
        %1738 = vmatpush1.msra.mxu0 %v1655
        %1739 = vmatprep.subr.mxu0 0.0
        %1740 = vmatpush1.msra.mxu0 0.0
        %1741 = vmatprep.subr.mxu0 0.0
        %1742 = vmatpush1.msra.mxu0 0.0
        %1743 = vmatprep.subr.mxu0 0.0
        %1744 = vmatpush1.msra.mxu0 0.0
        %1745 = vmatprep.subr.mxu0 0.0
        %1746 = vmatpush1.msra.mxu0 0.0
        %1747 = vmatprep.subr.mxu0 0.0
        %1748 = vmatpush1.msra.mxu0 0.0
        %1749 = vmatprep.subr.mxu0 0.0
        %1750 = vmatpush1.msra.mxu0 0.0
        %1751 = vmatprep.subr.mxu0 0.0
        %1752 = vmatpush1.msra.mxu0 0.0
        %1753 = vmatprep.subr.mxu0 0.0
        %1754 = vmatpush1.msra.mxu0 0.0
        %1755 = vmatprep.subr.mxu0 0.0
        %1756 = vmatpush1.msra.mxu0 0.0
        %1757 = vmatprep.subr.mxu0 0.0
        %1758 = vmatpush1.msra.mxu0 0.0
        %1759 = vmatprep.subr.mxu0 0.0
        %1760 = vmatpush1.msra.mxu0 0.0
        %1761 = vmatprep.subr.mxu0 0.0
        %1762 = vmatpush1.msra.mxu0 0.0
        %1763 = vmatprep.subr.mxu0 0.0
        %1764 = vmatpush1.msra.mxu0 0.0
        %1765 = vmatprep.subr.mxu0 0.0
        %1766 = vmatpush1.msra.mxu0 0.0
        %1767 = vmatprep.subr.mxu0 0.0
        %1768 = vmatpush1.msra.mxu0 0.0
        %1769 = vmatprep.subr.mxu0 0.0
        %1770 = vmatpush1.msra.mxu0 0.0
        %1771 = vmatprep.subr.mxu0 0.0
        %1772 = vmatpush1.msra.mxu0 0.0
        %1773 = vmatprep.subr.mxu0 0.0
        %1774 = vmatpush1.msra.mxu0 0.0
        %1775 = vmatprep.subr.mxu0 0.0
        %1776 = vmatpush1.msra.mxu0 0.0
        %1777 = vmatprep.subr.mxu0 0.0
        %1778 = vmatpush1.msra.mxu0 0.0
        %1779 = vmatprep.subr.mxu0 0.0
        %1780 = vmatpush1.msra.mxu0 0.0
        %1781 = vmatprep.subr.mxu0 0.0
        %1782 = vmatpush1.msra.mxu0 0.0
        %1783 = vmatprep.subr.mxu0 0.0
        %1784 = vmatpush1.msra.mxu0 0.0
        %1785 = vmatprep.subr.mxu0 0.0
        %1786 = vmatpush1.msra.mxu0 0.0
        %1787 = vmatprep.subr.mxu0 0.0
        %1788 = vmatpush1.msra.mxu0 0.0
        %1789 = vmatprep.subr.mxu0 0.0
        %1790 = vmatpush1.msra.mxu0 0.0
        %1791 = vmatprep.subr.mxu0 0.0
        %1792 = vmatpush1.msra.mxu0 0.0
        %1793 = vmatprep.subr.mxu0 0.0
        %1794 = vmatpush1.msra.mxu0 0.0
        %1795 = vmatprep.subr.mxu0 0.0
        %1796 = vmatpush1.msra.mxu0 0.0
        %1797 = vmatprep.subr.mxu0 0.0
        %1798 = vmatpush1.msra.mxu0 0.0
        %1799 = vmatprep.subr.mxu0 0.0
        %1800 = vmatpush1.msra.mxu0 0.0
        %1801 = vmatprep.mubr.f32.mxu0 0.0
        %1802 = vmatmul.mubr.f32.gmra.mrb[0].mxu0 %v1643
        %v1803 = vpop.f32.mrb[0].mxu0
        %v1804 = vadd.f32 %v1634, %v1803
        %v1805 = vpop.f32.mrb[0].mxu0
        %v1806 = vadd.f32 %v1634, %v1805
        %1807 = vmatprep.mubr.f32.mxu0 0.0
        %1808 = vmatmul.mubr.f32.gmra.mrb[0].mxu0 %v1646
        %v1809 = vpop.f32.mrb[0].mxu0
        %v1810 = vadd.f32 %v1639, %v1809
        %v1811 = vpop.f32.mrb[0].mxu0
        %v1812 = vadd.f32 %v1639, %v1811
        %1813 = vdwg.mxu0
        %1814 = vst [vmem:[%s525] sm:$0xff] %v1727
        %1815 = vst [vmem:[%s525 + $0x8] sm:$0xff] %v1729
        %1816 = vst [vmem:[%s525 + $0x10] sm:$0xff] %v1804
        %1817 = vst [vmem:[%s525 + $0x18] sm:$0xff] %v1806
        %1818 = vst [vmem:[%s525 + $0x20] sm:$0x7] %v1733
        %1819 = vst [vmem:[%s525 + $0x28] sm:$0x7] %v1735
        %1820 = vst [vmem:[%s525 + $0x30] sm:$0x7] %v1810
        %1821 = vst [vmem:[%s525 + $0x38] sm:$0x7] %v1812
        %s1822 = sand.u32 %s362, 1
        %s1823 = sand.u32 %s362, 1
        %s1824 = smul.addr %s1823, 64
        %s1825 = scalar_lea.vmem [#allocation4], %s1824
        // Predicated region
        $region81: #{tpu_custom_call.1} parent=75 // pred_check
          %p1826 = pneg %p372
        $region82: #{tpu_custom_call.1} parent=75 // pred_check_branch
          %1828 = sbr.rel (%p1826) target = $region84
        $region83: #{tpu_custom_call.1} parent=75 // pred_region
          %s1829 = smul.u32 4, %s33
          %s1830 = smul.addr %s32, 16
          %s1831 = sadd.s32 %s1829, %s1830
          %s1832 = smul.addr %s1831, 8
          %s1833 = scalar_lea.vmem %s14, %s1832
          // Predicated region
          $region85: #{tpu_custom_call.1} parent=83 // pred_check
            _
          $region86: #{tpu_custom_call.1} parent=83 // pred_check_branch
            %1835 = sbr.rel (0) target = $region88
          $region87: #{tpu_custom_call.1} parent=83 // pred_region
            // Predicated region
            $region89: #{tpu_custom_call.1} parent=87 // pred_check
              _
            $region90: #{tpu_custom_call.1} parent=87 // pred_check_branch
              %1837 = sbr.rel (0) target = $region92
            $region91: #{tpu_custom_call.1} parent=87 // pred_region
              loop: start=0, step=1, limit=1
              $region93: #{tpu_custom_call.1} parent=91 // loop_pre_header
                _
              $region94: #{tpu_custom_call.1} parent=91 // loop_header
                %s1839 = sphi 0, %s1843
                %p1840 = scmp.ge.s32.totalorder %s1839, 1
                %s1844 = sphi %s1825, %s1825
                %s1845 = sphi %s1833, %s1833
              $region95: #{tpu_custom_call.1} parent=91 // loop_header_branch
                %1842 = sbr.rel (%p1840) target = $region99
              $region96: #{tpu_custom_call.1} parent=91 // loop_body
                %v1846 = vld [vmem:[%s1844] sm:$0xff]
                %1847 = vst [vmem:[%s1845] sm:$0xff] %v1846
                %v1848 = vld [vmem:[%s1844 + $0x8] sm:$0xff]
                %1849 = vst [vmem:[%s1845 + $0x8] sm:$0xff] %v1848
                %v1850 = vld [vmem:[%s1844 + $0x10] sm:$0xff]
                %1851 = vst [vmem:[%s1845 + $0x10] sm:$0xff] %v1850
                %v1852 = vld [vmem:[%s1844 + $0x18] sm:$0xff]
                %1853 = vst [vmem:[%s1845 + $0x18] sm:$0xff] %v1852
                %v1854 = vld [vmem:[%s1844 + $0x20] sm:$0xff]
                %1855 = vst [vmem:[%s1845 + $0x40] sm:$0xff] %v1854
                %v1856 = vld [vmem:[%s1844 + $0x28] sm:$0xff]
                %1857 = vst [vmem:[%s1845 + $0x48] sm:$0xff] %v1856
                %v1858 = vld [vmem:[%s1844 + $0x30] sm:$0xff]
                %1859 = vst [vmem:[%s1845 + $0x50] sm:$0xff] %v1858
                %v1860 = vld [vmem:[%s1844 + $0x38] sm:$0xff]
                %1861 = vst [vmem:[%s1845 + $0x58] sm:$0xff] %v1860
              $region97: #{tpu_custom_call.1} parent=91 // loop_footer
                %s1843 = sadd.s32 1, %s1839
              $region98: #{tpu_custom_call.1} parent=91 // loop_footer_branch
                %1838 = sbr.rel target = $region94
              $region99: #{tpu_custom_call.1} parent=91 // loop_exit
                _
            $region92: #{tpu_custom_call.1} parent=87 // pred_fallthru
              _
            // Predicated region
            $region100: #{tpu_custom_call.1} parent=87 // pred_check
              _
            $region101: #{tpu_custom_call.1} parent=87 // pred_check_branch
              %1863 = sbr.rel target = $region103
            $region102: #{tpu_custom_call.1} parent=87 // pred_region
              _
            $region103: #{tpu_custom_call.1} parent=87 // pred_fallthru
              _
          $region88: #{tpu_custom_call.1} parent=83 // pred_fallthru
            _
          %1864 = vnop
        $region84: #{tpu_custom_call.1} parent=75 // pred_fallthru
          _
      $region76: #{tpu_custom_call.1} parent=5 // pred_fallthru
        _
      %p1865 = scmp.le.s32.totalorder 2, %s23
      // Predicated region
      $region104: #{tpu_custom_call.1} parent=5 // pred_check
        %p1866 = pneg %p1865
      $region105: #{tpu_custom_call.1} parent=5 // pred_check_branch
        %1868 = sbr.rel (%p1866) target = $region107
      $region106: #{tpu_custom_call.1} parent=5 // pred_region
        %s1869 = ssub.s32 %s23, 2
        // Predicated region
        $region108: #{tpu_custom_call.1} parent=106 // pred_check
          %p1870 = pneg %p378
        $region109: #{tpu_custom_call.1} parent=106 // pred_check_branch
          %1872 = sbr.rel (%p1870) target = $region111
        $region110: #{tpu_custom_call.1} parent=106 // pred_region
          %s1873 = sand.u32 %s363, 1
          %s1874 = sand.u32 %s363, 1
          %s1875 = smul.addr %s1874, 64
          %s1876 = scalar_lea.vmem [#allocation4], %s1875
        $region111: #{tpu_custom_call.1} parent=106 // pred_fallthru
          _
      $region107: #{tpu_custom_call.1} parent=5 // pred_fallthru
        _
    $region6: #{tpu_custom_call.1} parent=1 // loop_footer
      %s27 = sadd.s32 1, %s23
    $region7: #{tpu_custom_call.1} parent=1 // loop_footer_branch
      %22 = sbr.rel target = $region3
    $region8: #{tpu_custom_call.1} parent=1 // loop_exit
      _
    %1877 = vsyncpa [#allocation3], 1
    %s1878 = scalar_lea.sflag [#allocation3], 1
    %1879 = vsyncpa %s1878, 1

</llo_original>
